<compile_context>
chip_gen: v7x
topology: tpu7x:2x2x1
jax: 0.10.0
libtpu: 0.0.40
codegen_flags: <defaults>
</compile_context>

<pallas_src>
import functools

import jax
import jax.numpy as jnp
from jax.experimental import pallas as pl
from jax.experimental.pallas import tpu as pltpu

IN_FEATS = 28 * 28   # 784
HIDDEN = 512
OUT_FEATS = 10
OUT_PAD = 128        # lane-dense padded logit width


def mlp_kernel(x_ref, w1_ref, b1_ref, w2_ref, b2_ref, w3_ref, b3_ref, o_ref):
    """Full fused forward pass for one batch tile.

    x_ref : (TB, 784)  f32 or bf16 activations tile
    w1    : (784, 512) bf16,  b1: (1, 512) epilogue dtype (bf16 on v6e/v7x, f32 on v5e)
    w2    : (512, 512) bf16,  b2: (1, 512) epilogue dtype
    w3    : (512, 128) bf16 (zero-padded cols 10..127), b3: (1, 128) f32
    o_ref : (TB, 128)  f32 (cols 10..127 are zeros)
    """
    tb = x_ref.shape[0]
    # 2-way row sub-tiling for large tiles: the second half's GEMMs can
    # co-issue with the first half's VPU epilogue (bias/ReLU/cast).
    n_sub = 2 if (tb >= 256 and tb % 16 == 0) else 1
    rows = tb // n_sub

    w1 = w1_ref[...]
    w2 = w2_ref[...]
    w3 = w3_ref[...]
    b1 = b1_ref[...]
    b2 = b2_ref[...]
    b3 = b3_ref[...]

    for s in range(n_sub):  # static 1- or 2-way unroll
        lo = s * rows

        # fc1 + ReLU (dropout1 is identity in eval mode)
        x = x_ref[pl.ds(lo, rows), :].astype(jnp.bfloat16)
        acc1 = jnp.dot(x, w1, preferred_element_type=jnp.float32)
        h1 = jnp.maximum(acc1.astype(b1.dtype) + b1, 0).astype(jnp.bfloat16)

        # fc2 + ReLU (dropout2 is identity in eval mode)
        acc2 = jnp.dot(h1, w2, preferred_element_type=jnp.float32)
        h2 = jnp.maximum(acc2.astype(b2.dtype) + b2, 0).astype(jnp.bfloat16)

        # fc3 (logits, lane-dense padded to 128, f32 out)
        out = jnp.dot(h2, w3, preferred_element_type=jnp.float32) + b3
        o_ref[pl.ds(lo, rows), :] = out.astype(o_ref.dtype)


def _choose_tile(batch, tb_max):
    """Batch tile: multiple of 8, <= tb_max, single tile for small batches."""
    b8 = max(8, 8 * pl.cdiv(batch, 8))   # round batch up to a multiple of 8
    return min(tb_max, b8)


def _epilogue_dtype():
    """bf16 bias/ReLU epilogue on bf16-VPU chips (v6e/v7x); f32 otherwise (v5e)."""
    try:
        kind = jax.devices()[0].device_kind.lower()
    except Exception:
        return jnp.float32
    if any(tag in kind for tag in ("v6", "v7", "7x")):
        return jnp.bfloat16
    return jnp.float32


@functools.partial(jax.jit, static_argnames=("tb",))
def mlp_net_forward(x, params, tb=512):
    """x: (B, 1, 28, 28) NCHW (or anything reshapeable to (-1, 784), like torch .view)."""
    x2d = x.reshape(-1, IN_FEATS)
    # Keep bf16 inputs as-is (halves activation DMA); anything else goes in as f32
    # and is cast to bf16 inside the kernel (no extra wrapper-side HBM pass).
    if x2d.dtype != jnp.bfloat16:
        x2d = x2d.astype(jnp.float32)
    B = x2d.shape[0]

    tb_eff = _choose_tile(B, tb)
    B_pad = pl.cdiv(B, tb_eff) * tb_eff
    if B_pad != B:
        x2d = jnp.pad(x2d, ((0, B_pad - B), (0, 0)))

    ep_dtype = _epilogue_dtype()

    w1, b1, w2, b2, w3, b3 = params
    # bf16 matmul operands (MXU-native); bias dtype matches the epilogue path.
    w1 = w1.astype(jnp.bfloat16)
    w2 = w2.astype(jnp.bfloat16)
    b1 = b1.reshape(1, HIDDEN).astype(ep_dtype)
    b2 = b2.reshape(1, HIDDEN).astype(ep_dtype)
    # Zero-pad the 10-wide logit projection to 128 lanes (lane-dense output).
    w3p = jnp.zeros((HIDDEN, OUT_PAD), jnp.bfloat16).at[:, :OUT_FEATS].set(
        w3.astype(jnp.bfloat16))
    b3p = jnp.zeros((1, OUT_PAD), jnp.float32).at[:, :OUT_FEATS].set(
        b3.reshape(1, OUT_FEATS).astype(jnp.float32))

    grid = (B_pad // tb_eff,)

    # Weights / biases sit fully in VMEM every grid step (constant index_map).
    def const(*dims):
        return pl.BlockSpec(dims, lambda i: tuple(0 for _ in dims))

    x_bytes = x2d.dtype.itemsize
    flops = 2 * B_pad * (IN_FEATS * HIDDEN + HIDDEN * HIDDEN + HIDDEN * OUT_PAD)
    bytes_accessed = (
        B_pad * IN_FEATS * x_bytes                                        # x
        + (IN_FEATS * HIDDEN + HIDDEN * HIDDEN + HIDDEN * OUT_PAD) * 2    # weights (bf16)
        + 2 * HIDDEN * jnp.dtype(ep_dtype).itemsize + OUT_PAD * 4         # biases
        + B_pad * OUT_PAD * 4                                             # logits (f32)
    )

    out_padded = pl.pallas_call(
        mlp_kernel,
        out_shape=jax.ShapeDtypeStruct((B_pad, OUT_PAD), jnp.float32),
        grid_spec=pltpu.PrefetchScalarGridSpec(
            num_scalar_prefetch=0,
            grid=grid,
            in_specs=[
                pl.BlockSpec((tb_eff, IN_FEATS), lambda i: (i, 0)),   # x tile
                const(IN_FEATS, HIDDEN),                              # w1
                const(1, HIDDEN),                                     # b1
                const(HIDDEN, HIDDEN),                                # w2
                const(1, HIDDEN),                                     # b2
                const(HIDDEN, OUT_PAD),                               # w3 (padded)
                const(1, OUT_PAD),                                    # b3 (padded)
            ],
            out_specs=pl.BlockSpec((tb_eff, OUT_PAD), lambda i: (i, 0)),
        ),
        compiler_params=pltpu.CompilerParams(
            dimension_semantics=("parallel",),
        ),
        cost_estimate=pl.CostEstimate(
            flops=flops, transcendentals=0, bytes_accessed=int(bytes_accessed)),
    )(x2d, w1, b1, w2, b2, w3p, b3p)

    return out_padded[:B, :OUT_FEATS]


def init_params(key):
    """Deterministic init matching nn.Linear's U(-1/sqrt(fan_in), 1/sqrt(fan_in))."""
    ks = jax.random.split(key, 6)

    def linear(kw, kb, fan_in, fan_out):
        bound = 1.0 / jnp.sqrt(jnp.float32(fan_in))
        w = jax.random.uniform(kw, (fan_in, fan_out), jnp.float32, -bound, bound)
        b = jax.random.uniform(kb, (fan_out,), jnp.float32, -bound, bound)
        return w, b

    w1, b1 = linear(ks[0], ks[1], IN_FEATS, HIDDEN)
    w2, b2 = linear(ks[2], ks[3], HIDDEN, HIDDEN)
    w3, b3 = linear(ks[4], ks[5], HIDDEN, OUT_FEATS)
    return (w1, b1, w2, b2, w3, b3)


def mlp_ref(x, params):
    """Pure-JAX f32 reference (eval-mode forward)."""
    w1, b1, w2, b2, w3, b3 = params
    x2d = x.reshape(-1, IN_FEATS).astype(jnp.float32)
    h1 = jnp.maximum(x2d @ w1 + b1, 0.0)
    h2 = jnp.maximum(h1 @ w2 + b2, 0.0)
    return h2 @ w3 + b3


if __name__ == "__main__":
    key = jax.random.PRNGKey(0)
    k_params, k_x1, k_x2 = jax.random.split(key, 3)
    params = init_params(k_params)

    # Small MNIST-like batch: single-tile grid (no forced 2-step split).
    x_small = jax.random.normal(k_x1, (32, 1, 28, 28), jnp.float32)
    out_small = jax.block_until_ready(mlp_net_forward(x_small, params))
    ref_small = mlp_ref(x_small, params)
    assert out_small.shape == (32, OUT_FEATS), out_small.shape
    assert jnp.allclose(out_small, ref_small, atol=5e-2, rtol=5e-2), \
        "small-batch mismatch vs reference"

    # Larger batch: exercises tb=512 tiles, batch padding, a multi-step grid
    # and the in-kernel 2-way row sub-tiling.
    x_big = jax.random.normal(k_x2, (520, 1, 28, 28), jnp.float32)
    out_big = jax.block_until_ready(mlp_net_forward(x_big, params))
    ref_big = mlp_ref(x_big, params)
    assert out_big.shape == (520, OUT_FEATS), out_big.shape
    assert jnp.allclose(out_big, ref_big, atol=5e-2, rtol=5e-2), \
        "large-batch mismatch vs reference"

    print("KERNEL_OK")
</pallas_src>

<mosaic_0001>
module attributes {stable_mosaic.version = 11 : i64} {
  func.func @mlp_kernel(%arg0: i32, %arg1: memref<32x784xf32, #tpu.memory_space<vmem>>, %arg2: memref<784x512xbf16, #tpu.memory_space<vmem>>, %arg3: memref<1x512xf32, #tpu.memory_space<vmem>>, %arg4: memref<512x512xbf16, #tpu.memory_space<vmem>>, %arg5: memref<1x512xf32, #tpu.memory_space<vmem>>, %arg6: memref<512x128xbf16, #tpu.memory_space<vmem>>, %arg7: memref<1x128xf32, #tpu.memory_space<vmem>>, %arg8: memref<32x128xf32, #tpu.memory_space<vmem>>) attributes {dimension_semantics = [#tpu.dimension_semantics<parallel>], iteration_bounds = array<i64: 1>, scalar_prefetch = 0 : i64, scratch_operands = 0 : i64, tpu.core_type = #tpu.core_type<tc>, window_params = [{transform_indices = @transform_0, window_bounds = array<i64: 32, 784>}, {pipeline_mode = #tpu.pipeline_mode<synchronous>, transform_indices = @transform_1, window_bounds = array<i64: 784, 512>}, {pipeline_mode = #tpu.pipeline_mode<synchronous>, transform_indices = @transform_2, window_bounds = array<i64: 1, 512>}, {pipeline_mode = #tpu.pipeline_mode<synchronous>, transform_indices = @transform_3, window_bounds = array<i64: 512, 512>}, {pipeline_mode = #tpu.pipeline_mode<synchronous>, transform_indices = @transform_4, window_bounds = array<i64: 1, 512>}, {pipeline_mode = #tpu.pipeline_mode<synchronous>, transform_indices = @transform_5, window_bounds = array<i64: 512, 128>}, {pipeline_mode = #tpu.pipeline_mode<synchronous>, transform_indices = @transform_6, window_bounds = array<i64: 1, 128>}, {transform_indices = @transform_7, window_bounds = array<i64: 32, 128>}]} {
    %c0 = arith.constant 0 : index
    %c0_0 = arith.constant 0 : index
    %0 = vector.load %arg2[%c0, %c0_0] : memref<784x512xbf16, #tpu.memory_space<vmem>>, vector<784x512xbf16>
    %c0_1 = arith.constant 0 : index
    %c0_2 = arith.constant 0 : index
    %1 = vector.load %arg4[%c0_1, %c0_2] : memref<512x512xbf16, #tpu.memory_space<vmem>>, vector<512x512xbf16>
    %c0_3 = arith.constant 0 : index
    %c0_4 = arith.constant 0 : index
    %2 = vector.load %arg6[%c0_3, %c0_4] : memref<512x128xbf16, #tpu.memory_space<vmem>>, vector<512x128xbf16>
    %c0_5 = arith.constant 0 : index
    %c0_6 = arith.constant 0 : index
    %3 = vector.load %arg3[%c0_5, %c0_6] : memref<1x512xf32, #tpu.memory_space<vmem>>, vector<1x512xf32>
    %c0_7 = arith.constant 0 : index
    %c0_8 = arith.constant 0 : index
    %4 = vector.load %arg5[%c0_7, %c0_8] : memref<1x512xf32, #tpu.memory_space<vmem>>, vector<1x512xf32>
    %c0_9 = arith.constant 0 : index
    %c0_10 = arith.constant 0 : index
    %5 = vector.load %arg7[%c0_9, %c0_10] : memref<1x128xf32, #tpu.memory_space<vmem>>, vector<1x128xf32>
    %c0_11 = arith.constant 0 : index
    %c0_12 = arith.constant 0 : index
    %6 = vector.load %arg1[%c0_11, %c0_12] : memref<32x784xf32, #tpu.memory_space<vmem>>, vector<32x784xf32>
    %7 = arith.truncf %6 : vector<32x784xf32> to vector<32x784xbf16>
    %cst = arith.constant dense<0.000000e+00> : vector<32x512xf32>
    %8 = tpu.matmul %7, %0, %cst {dimension_numbers = #tpu.dot_dimension_numbers<[1], [0], [0], [1], [0, 0, 1, 1], [], []>} : vector<32x784xbf16>, vector<784x512xbf16>, vector<32x512xf32> -> vector<32x512xf32>
    %9 = vector.broadcast %3 : vector<1x512xf32> to vector<32x512xf32>
    %10 = arith.addf %8, %9 : vector<32x512xf32>
    %cst_13 = arith.constant 0.000000e+00 : f32
    %11 = vector.broadcast %cst_13 : f32 to vector<32x512xf32>
    %12 = arith.maximumf %10, %11 : vector<32x512xf32>
    %13 = arith.truncf %12 : vector<32x512xf32> to vector<32x512xbf16>
    %cst_14 = arith.constant dense<0.000000e+00> : vector<32x512xf32>
    %14 = tpu.matmul %13, %1, %cst_14 {dimension_numbers = #tpu.dot_dimension_numbers<[1], [0], [0], [1], [0, 0, 1, 1], [], []>} : vector<32x512xbf16>, vector<512x512xbf16>, vector<32x512xf32> -> vector<32x512xf32>
    %15 = vector.broadcast %4 : vector<1x512xf32> to vector<32x512xf32>
    %16 = arith.addf %14, %15 : vector<32x512xf32>
    %cst_15 = arith.constant 0.000000e+00 : f32
    %17 = vector.broadcast %cst_15 : f32 to vector<32x512xf32>
    %18 = arith.maximumf %16, %17 : vector<32x512xf32>
    %19 = arith.truncf %18 : vector<32x512xf32> to vector<32x512xbf16>
    %cst_16 = arith.constant dense<0.000000e+00> : vector<32x128xf32>
    %20 = tpu.matmul %19, %2, %cst_16 {dimension_numbers = #tpu.dot_dimension_numbers<[1], [0], [0], [1], [0, 0, 1, 1], [], []>} : vector<32x512xbf16>, vector<512x128xbf16>, vector<32x128xf32> -> vector<32x128xf32>
    %21 = vector.broadcast %5 : vector<1x128xf32> to vector<32x128xf32>
    %22 = arith.addf %20, %21 : vector<32x128xf32>
    %c0_17 = arith.constant 0 : index
    %c0_18 = arith.constant 0 : index
    %23 = vector.load %arg8[%c0_17, %c0_18] : memref<32x128xf32, #tpu.memory_space<vmem>>, vector<32x128xf32>
    tpu.vector_store %arg8[%c0_17, %c0_18], %22 {strides = array<i32>} : memref<32x128xf32, #tpu.memory_space<vmem>>, vector<32x128xf32>,
    return
  }
  func.func @transform_0(%arg0: i32) -> (i32, i32) {
    %c0_i32 = arith.constant 0 : i32
    %c0_i32_0 = arith.constant 0 : i32
    return %arg0, %c0_i32 : i32, i32
  }
  func.func @transform_1(%arg0: i32) -> (i32, i32) {
    %c0_i32 = arith.constant 0 : i32
    %c0_i32_0 = arith.constant 0 : i32
    %c0_i32_1 = arith.constant 0 : i32
    return %c0_i32, %c0_i32_0 : i32, i32
  }
  func.func @transform_2(%arg0: i32) -> (i32, i32) {
    %c0_i32 = arith.constant 0 : i32
    %c0_i32_0 = arith.constant 0 : i32
    %c0_i32_1 = arith.constant 0 : i32
    return %c0_i32, %c0_i32_0 : i32, i32
  }
  func.func @transform_3(%arg0: i32) -> (i32, i32) {
    %c0_i32 = arith.constant 0 : i32
    %c0_i32_0 = arith.constant 0 : i32
    %c0_i32_1 = arith.constant 0 : i32
    return %c0_i32, %c0_i32_0 : i32, i32
  }
  func.func @transform_4(%arg0: i32) -> (i32, i32) {
    %c0_i32 = arith.constant 0 : i32
    %c0_i32_0 = arith.constant 0 : i32
    %c0_i32_1 = arith.constant 0 : i32
    return %c0_i32, %c0_i32_0 : i32, i32
  }
  func.func @transform_5(%arg0: i32) -> (i32, i32) {
    %c0_i32 = arith.constant 0 : i32
    %c0_i32_0 = arith.constant 0 : i32
    %c0_i32_1 = arith.constant 0 : i32
    return %c0_i32, %c0_i32_0 : i32, i32
  }
  func.func @transform_6(%arg0: i32) -> (i32, i32) {
    %c0_i32 = arith.constant 0 : i32
    %c0_i32_0 = arith.constant 0 : i32
    %c0_i32_1 = arith.constant 0 : i32
    return %c0_i32, %c0_i32_0 : i32, i32
  }
  func.func @transform_7(%arg0: i32) -> (i32, i32) {
    %c0_i32 = arith.constant 0 : i32
    %c0_i32_0 = arith.constant 0 : i32
    return %arg0, %c0_i32 : i32, i32
  }
}

</mosaic_0001>

<llo_original>
// kernel: mlp_net_forward.1
$region0: #{mlp_net_forward.1}
  #allocation0 [shape = 'u32[]', space=smem, size = 0x4, offset = 0x4, fixed_abs, tag = 'smem constant byte address 0x4 - core index']
  #allocation1 [shape = 'u32[144,128]{1,0:T(1,128)}', space=vmem, size = 0x12000, scoped, tag = 'internal scratch']
  %s0 = inlined_call_operand.vmem [shape: f32[32,784], index: 0, kind: input, shape index: {}]
  %s1 = inlined_call_operand.vmem [shape: bf16[784,512], index: 1, kind: input, shape index: {}]
  %s2 = inlined_call_operand.vmem [shape: f32[1,512], index: 2, kind: input, shape index: {}]
  %s3 = inlined_call_operand.vmem [shape: bf16[512,512], index: 3, kind: input, shape index: {}]
  %s4 = inlined_call_operand.vmem [shape: f32[1,512], index: 4, kind: input, shape index: {}]
  %s5 = inlined_call_operand.vmem [shape: bf16[512,128], index: 5, kind: input, shape index: {}]
  %s6 = inlined_call_operand.vmem [shape: f32[1,128], index: 6, kind: input, shape index: {}]
  %s7 = inlined_call_operand.vmem [shape: f32[32,128], index: 7, kind: output, shape index: {}]
  %s8 = sld [smem:[#allocation0]]
  $region38: #{mlp_net_forward.1} parent=0
    _
  %s10 = ssub.s32 1, %s8
  %s11 = scalar_select 0, %s10, %s8
  // Predicated region
  $region2: #{mlp_net_forward.1} parent=0 // pred_check
    _
  $region3: #{mlp_net_forward.1} parent=0 // pred_check_branch
    %13 = sbr.rel (0) target = $region5
  $region4: #{mlp_net_forward.1} parent=0 // pred_region
    _
  $region5: #{mlp_net_forward.1} parent=0 // pred_fallthru
    _
  // Predicated region
  $region6: #{mlp_net_forward.1} parent=0 // pred_check
    _
  $region7: #{mlp_net_forward.1} parent=0 // pred_check_branch
    %15 = sbr.rel (0) target = $region9
  $region8: #{mlp_net_forward.1} parent=0 // pred_region
    _
  $region9: #{mlp_net_forward.1} parent=0 // pred_fallthru
    _
  // Predicated region
  $region10: #{mlp_net_forward.1} parent=0 // pred_check
    _
  $region11: #{mlp_net_forward.1} parent=0 // pred_check_branch
    %17 = sbr.rel (0) target = $region13
  $region12: #{mlp_net_forward.1} parent=0 // pred_region
    _
  $region13: #{mlp_net_forward.1} parent=0 // pred_fallthru
    _
  // Predicated region
  $region14: #{mlp_net_forward.1} parent=0 // pred_check
    _
  $region15: #{mlp_net_forward.1} parent=0 // pred_check_branch
    %19 = sbr.rel (0) target = $region17
  $region16: #{mlp_net_forward.1} parent=0 // pred_region
    _
  $region17: #{mlp_net_forward.1} parent=0 // pred_fallthru
    _
  // Predicated region
  $region18: #{mlp_net_forward.1} parent=0 // pred_check
    _
  $region19: #{mlp_net_forward.1} parent=0 // pred_check_branch
    %21 = sbr.rel (0) target = $region21
  $region20: #{mlp_net_forward.1} parent=0 // pred_region
    _
  $region21: #{mlp_net_forward.1} parent=0 // pred_fallthru
    _
  // Predicated region
  $region22: #{mlp_net_forward.1} parent=0 // pred_check
    _
  $region23: #{mlp_net_forward.1} parent=0 // pred_check_branch
    %23 = sbr.rel (0) target = $region25
  $region24: #{mlp_net_forward.1} parent=0 // pred_region
    _
  $region25: #{mlp_net_forward.1} parent=0 // pred_fallthru
    _
  // Predicated region
  $region26: #{mlp_net_forward.1} parent=0 // pred_check
    _
  $region27: #{mlp_net_forward.1} parent=0 // pred_check_branch
    %25 = sbr.rel (0) target = $region29
  $region28: #{mlp_net_forward.1} parent=0 // pred_region
    _
  $region29: #{mlp_net_forward.1} parent=0 // pred_fallthru
    _
  %v27 = vld [vmem:[%s1] sm:$0xff]
  %v28 = vld [vmem:[%s1 + $0x8] sm:$0xff]
  %v29 = vld [vmem:[%s1 + $0x10] sm:$0xff]
  %v30 = vld [vmem:[%s1 + $0x18] sm:$0xff]
  %v31 = vld [vmem:[%s1 + $0x20] sm:$0xff]
  %v32 = vld [vmem:[%s1 + $0x28] sm:$0xff]
  %v33 = vld [vmem:[%s1 + $0x30] sm:$0xff]
  %v34 = vld [vmem:[%s1 + $0x38] sm:$0xff]
  %v35 = vld [vmem:[%s1 + $0x40] sm:$0xff]
  %v36 = vld [vmem:[%s1 + $0x48] sm:$0xff]
  %v37 = vld [vmem:[%s1 + $0x50] sm:$0xff]
  %v38 = vld [vmem:[%s1 + $0x58] sm:$0xff]
  %v39 = vld [vmem:[%s1 + $0x60] sm:$0xff]
  %v40 = vld [vmem:[%s1 + $0x68] sm:$0xff]
  %v41 = vld [vmem:[%s1 + $0x70] sm:$0xff]
  %v42 = vld [vmem:[%s1 + $0x78] sm:$0xff]
  %v43 = vld [vmem:[%s1 + $0x80] sm:$0xff]
  %v44 = vld [vmem:[%s1 + $0x88] sm:$0xff]
  %v45 = vld [vmem:[%s1 + $0x90] sm:$0xff]
  %v46 = vld [vmem:[%s1 + $0x98] sm:$0xff]
  %v47 = vld [vmem:[%s1 + $0xa0] sm:$0xff]
  %v48 = vld [vmem:[%s1 + $0xa8] sm:$0xff]
  %v49 = vld [vmem:[%s1 + $0xb0] sm:$0xff]
  %v50 = vld [vmem:[%s1 + $0xb8] sm:$0xff]
  %v51 = vld [vmem:[%s1 + $0xc0] sm:$0xff]
  %v52 = vld [vmem:[%s1 + $0xc8] sm:$0xff]
  %v53 = vld [vmem:[%s1 + $0xd0] sm:$0xff]
  %v54 = vld [vmem:[%s1 + $0xd8] sm:$0xff]
  %v55 = vld [vmem:[%s1 + $0xe0] sm:$0xff]
  %v56 = vld [vmem:[%s1 + $0xe8] sm:$0xff]
  %v57 = vld [vmem:[%s1 + $0xf0] sm:$0xff]
  %v58 = vld [vmem:[%s1 + $0xf8] sm:$0xff]
  %v59 = vld [vmem:[%s1 + $0x100] sm:$0xff]
  %v60 = vld [vmem:[%s1 + $0x108] sm:$0xff]
  %v61 = vld [vmem:[%s1 + $0x110] sm:$0xff]
  %v62 = vld [vmem:[%s1 + $0x118] sm:$0xff]
  %v63 = vld [vmem:[%s1 + $0x120] sm:$0xff]
  %v64 = vld [vmem:[%s1 + $0x128] sm:$0xff]
  %v65 = vld [vmem:[%s1 + $0x130] sm:$0xff]
  %v66 = vld [vmem:[%s1 + $0x138] sm:$0xff]
  %v67 = vld [vmem:[%s1 + $0x140] sm:$0xff]
  %v68 = vld [vmem:[%s1 + $0x148] sm:$0xff]
  %v69 = vld [vmem:[%s1 + $0x150] sm:$0xff]
  %v70 = vld [vmem:[%s1 + $0x158] sm:$0xff]
  %v71 = vld [vmem:[%s1 + $0x160] sm:$0xff]
  %v72 = vld [vmem:[%s1 + $0x168] sm:$0xff]
  %v73 = vld [vmem:[%s1 + $0x170] sm:$0xff]
  %v74 = vld [vmem:[%s1 + $0x178] sm:$0xff]
  %v75 = vld [vmem:[%s1 + $0x180] sm:$0xff]
  %v76 = vld [vmem:[%s1 + $0x188] sm:$0xff]
  %v77 = vld [vmem:[%s1 + $0x190] sm:$0xff]
  %v78 = vld [vmem:[%s1 + $0x198] sm:$0xff]
  %v79 = vld [vmem:[%s1 + $0x1a0] sm:$0xff]
  %v80 = vld [vmem:[%s1 + $0x1a8] sm:$0xff]
  %v81 = vld [vmem:[%s1 + $0x1b0] sm:$0xff]
  %v82 = vld [vmem:[%s1 + $0x1b8] sm:$0xff]
  %v83 = vld [vmem:[%s1 + $0x1c0] sm:$0xff]
  %v84 = vld [vmem:[%s1 + $0x1c8] sm:$0xff]
  %v85 = vld [vmem:[%s1 + $0x1d0] sm:$0xff]
  %v86 = vld [vmem:[%s1 + $0x1d8] sm:$0xff]
  %v87 = vld [vmem:[%s1 + $0x1e0] sm:$0xff]
  %v88 = vld [vmem:[%s1 + $0x1e8] sm:$0xff]
  %v89 = vld [vmem:[%s1 + $0x1f0] sm:$0xff]
  %v90 = vld [vmem:[%s1 + $0x1f8] sm:$0xff]
  %v91 = vld [vmem:[%s1 + $0x200] sm:$0xff]
  %v92 = vld [vmem:[%s1 + $0x208] sm:$0xff]
  %v93 = vld [vmem:[%s1 + $0x210] sm:$0xff]
  %v94 = vld [vmem:[%s1 + $0x218] sm:$0xff]
  %v95 = vld [vmem:[%s1 + $0x220] sm:$0xff]
  %v96 = vld [vmem:[%s1 + $0x228] sm:$0xff]
  %v97 = vld [vmem:[%s1 + $0x230] sm:$0xff]
  %v98 = vld [vmem:[%s1 + $0x238] sm:$0xff]
  %v99 = vld [vmem:[%s1 + $0x240] sm:$0xff]
  %v100 = vld [vmem:[%s1 + $0x248] sm:$0xff]
  %v101 = vld [vmem:[%s1 + $0x250] sm:$0xff]
  %v102 = vld [vmem:[%s1 + $0x258] sm:$0xff]
  %v103 = vld [vmem:[%s1 + $0x260] sm:$0xff]
  %v104 = vld [vmem:[%s1 + $0x268] sm:$0xff]
  %v105 = vld [vmem:[%s1 + $0x270] sm:$0xff]
  %v106 = vld [vmem:[%s1 + $0x278] sm:$0xff]
  %v107 = vld [vmem:[%s1 + $0x280] sm:$0xff]
  %v108 = vld [vmem:[%s1 + $0x288] sm:$0xff]
  %v109 = vld [vmem:[%s1 + $0x290] sm:$0xff]
  %v110 = vld [vmem:[%s1 + $0x298] sm:$0xff]
  %v111 = vld [vmem:[%s1 + $0x2a0] sm:$0xff]
  %v112 = vld [vmem:[%s1 + $0x2a8] sm:$0xff]
  %v113 = vld [vmem:[%s1 + $0x2b0] sm:$0xff]
  %v114 = vld [vmem:[%s1 + $0x2b8] sm:$0xff]
  %v115 = vld [vmem:[%s1 + $0x2c0] sm:$0xff]
  %v116 = vld [vmem:[%s1 + $0x2c8] sm:$0xff]
  %v117 = vld [vmem:[%s1 + $0x2d0] sm:$0xff]
  %v118 = vld [vmem:[%s1 + $0x2d8] sm:$0xff]
  %v119 = vld [vmem:[%s1 + $0x2e0] sm:$0xff]
  %v120 = vld [vmem:[%s1 + $0x2e8] sm:$0xff]
  %v121 = vld [vmem:[%s1 + $0x2f0] sm:$0xff]
  %v122 = vld [vmem:[%s1 + $0x2f8] sm:$0xff]
  %v123 = vld [vmem:[%s1 + $0x300] sm:$0xff]
  %v124 = vld [vmem:[%s1 + $0x308] sm:$0xff]
  %v125 = vld [vmem:[%s1 + $0x310] sm:$0xff]
  %v126 = vld [vmem:[%s1 + $0x318] sm:$0xff]
  %v127 = vld [vmem:[%s1 + $0x320] sm:$0xff]
  %v128 = vld [vmem:[%s1 + $0x328] sm:$0xff]
  %v129 = vld [vmem:[%s1 + $0x330] sm:$0xff]
  %v130 = vld [vmem:[%s1 + $0x338] sm:$0xff]
  %v131 = vld [vmem:[%s1 + $0x340] sm:$0xff]
  %v132 = vld [vmem:[%s1 + $0x348] sm:$0xff]
  %v133 = vld [vmem:[%s1 + $0x350] sm:$0xff]
  %v134 = vld [vmem:[%s1 + $0x358] sm:$0xff]
  %v135 = vld [vmem:[%s1 + $0x360] sm:$0xff]
  %v136 = vld [vmem:[%s1 + $0x368] sm:$0xff]
  %v137 = vld [vmem:[%s1 + $0x370] sm:$0xff]
  %v138 = vld [vmem:[%s1 + $0x378] sm:$0xff]
  %v139 = vld [vmem:[%s1 + $0x380] sm:$0xff]
  %v140 = vld [vmem:[%s1 + $0x388] sm:$0xff]
  %v141 = vld [vmem:[%s1 + $0x390] sm:$0xff]
  %v142 = vld [vmem:[%s1 + $0x398] sm:$0xff]
  %v143 = vld [vmem:[%s1 + $0x3a0] sm:$0xff]
  %v144 = vld [vmem:[%s1 + $0x3a8] sm:$0xff]
  %v145 = vld [vmem:[%s1 + $0x3b0] sm:$0xff]
  %v146 = vld [vmem:[%s1 + $0x3b8] sm:$0xff]
  %v147 = vld [vmem:[%s1 + $0x3c0] sm:$0xff]
  %v148 = vld [vmem:[%s1 + $0x3c8] sm:$0xff]
  %v149 = vld [vmem:[%s1 + $0x3d0] sm:$0xff]
  %v150 = vld [vmem:[%s1 + $0x3d8] sm:$0xff]
  %v151 = vld [vmem:[%s1 + $0x3e0] sm:$0xff]
  %v152 = vld [vmem:[%s1 + $0x3e8] sm:$0xff]
  %v153 = vld [vmem:[%s1 + $0x3f0] sm:$0xff]
  %v154 = vld [vmem:[%s1 + $0x3f8] sm:$0xff]
  %v155 = vld [vmem:[%s1 + $0x400] sm:$0xff]
  %v156 = vld [vmem:[%s1 + $0x408] sm:$0xff]
  %v157 = vld [vmem:[%s1 + $0x410] sm:$0xff]
  %v158 = vld [vmem:[%s1 + $0x418] sm:$0xff]
  %v159 = vld [vmem:[%s1 + $0x420] sm:$0xff]
  %v160 = vld [vmem:[%s1 + $0x428] sm:$0xff]
  %v161 = vld [vmem:[%s1 + $0x430] sm:$0xff]
  %v162 = vld [vmem:[%s1 + $0x438] sm:$0xff]
  %v163 = vld [vmem:[%s1 + $0x440] sm:$0xff]
  %v164 = vld [vmem:[%s1 + $0x448] sm:$0xff]
  %v165 = vld [vmem:[%s1 + $0x450] sm:$0xff]
  %v166 = vld [vmem:[%s1 + $0x458] sm:$0xff]
  %v167 = vld [vmem:[%s1 + $0x460] sm:$0xff]
  %v168 = vld [vmem:[%s1 + $0x468] sm:$0xff]
  %v169 = vld [vmem:[%s1 + $0x470] sm:$0xff]
  %v170 = vld [vmem:[%s1 + $0x478] sm:$0xff]
  %v171 = vld [vmem:[%s1 + $0x480] sm:$0xff]
  %v172 = vld [vmem:[%s1 + $0x488] sm:$0xff]
  %v173 = vld [vmem:[%s1 + $0x490] sm:$0xff]
  %v174 = vld [vmem:[%s1 + $0x498] sm:$0xff]
  %v175 = vld [vmem:[%s1 + $0x4a0] sm:$0xff]
  %v176 = vld [vmem:[%s1 + $0x4a8] sm:$0xff]
  %v177 = vld [vmem:[%s1 + $0x4b0] sm:$0xff]
  %v178 = vld [vmem:[%s1 + $0x4b8] sm:$0xff]
  %v179 = vld [vmem:[%s1 + $0x4c0] sm:$0xff]
  %v180 = vld [vmem:[%s1 + $0x4c8] sm:$0xff]
  %v181 = vld [vmem:[%s1 + $0x4d0] sm:$0xff]
  %v182 = vld [vmem:[%s1 + $0x4d8] sm:$0xff]
  %v183 = vld [vmem:[%s1 + $0x4e0] sm:$0xff]
  %v184 = vld [vmem:[%s1 + $0x4e8] sm:$0xff]
  %v185 = vld [vmem:[%s1 + $0x4f0] sm:$0xff]
  %v186 = vld [vmem:[%s1 + $0x4f8] sm:$0xff]
  %v187 = vld [vmem:[%s1 + $0x500] sm:$0xff]
  %v188 = vld [vmem:[%s1 + $0x508] sm:$0xff]
  %v189 = vld [vmem:[%s1 + $0x510] sm:$0xff]
  %v190 = vld [vmem:[%s1 + $0x518] sm:$0xff]
  %v191 = vld [vmem:[%s1 + $0x520] sm:$0xff]
  %v192 = vld [vmem:[%s1 + $0x528] sm:$0xff]
  %v193 = vld [vmem:[%s1 + $0x530] sm:$0xff]
  %v194 = vld [vmem:[%s1 + $0x538] sm:$0xff]
  %v195 = vld [vmem:[%s1 + $0x540] sm:$0xff]
  %v196 = vld [vmem:[%s1 + $0x548] sm:$0xff]
  %v197 = vld [vmem:[%s1 + $0x550] sm:$0xff]
  %v198 = vld [vmem:[%s1 + $0x558] sm:$0xff]
  %v199 = vld [vmem:[%s1 + $0x560] sm:$0xff]
  %v200 = vld [vmem:[%s1 + $0x568] sm:$0xff]
  %v201 = vld [vmem:[%s1 + $0x570] sm:$0xff]
  %v202 = vld [vmem:[%s1 + $0x578] sm:$0xff]
  %v203 = vld [vmem:[%s1 + $0x580] sm:$0xff]
  %v204 = vld [vmem:[%s1 + $0x588] sm:$0xff]
  %v205 = vld [vmem:[%s1 + $0x590] sm:$0xff]
  %v206 = vld [vmem:[%s1 + $0x598] sm:$0xff]
  %v207 = vld [vmem:[%s1 + $0x5a0] sm:$0xff]
  %v208 = vld [vmem:[%s1 + $0x5a8] sm:$0xff]
  %v209 = vld [vmem:[%s1 + $0x5b0] sm:$0xff]
  %v210 = vld [vmem:[%s1 + $0x5b8] sm:$0xff]
  %v211 = vld [vmem:[%s1 + $0x5c0] sm:$0xff]
  %v212 = vld [vmem:[%s1 + $0x5c8] sm:$0xff]
  %v213 = vld [vmem:[%s1 + $0x5d0] sm:$0xff]
  %v214 = vld [vmem:[%s1 + $0x5d8] sm:$0xff]
  %v215 = vld [vmem:[%s1 + $0x5e0] sm:$0xff]
  %v216 = vld [vmem:[%s1 + $0x5e8] sm:$0xff]
  %v217 = vld [vmem:[%s1 + $0x5f0] sm:$0xff]
  %v218 = vld [vmem:[%s1 + $0x5f8] sm:$0xff]
  %v219 = vld [vmem:[%s1 + $0x600] sm:$0xff]
  %v220 = vld [vmem:[%s1 + $0x608] sm:$0xff]
  %v221 = vld [vmem:[%s1 + $0x610] sm:$0xff]
  %v222 = vld [vmem:[%s1 + $0x618] sm:$0xff]
  %v223 = vld [vmem:[%s3] sm:$0xff]
  %v224 = vld [vmem:[%s3 + $0x8] sm:$0xff]
  %v225 = vld [vmem:[%s3 + $0x10] sm:$0xff]
  %v226 = vld [vmem:[%s3 + $0x18] sm:$0xff]
  %v227 = vld [vmem:[%s3 + $0x20] sm:$0xff]
  %v228 = vld [vmem:[%s3 + $0x28] sm:$0xff]
  %v229 = vld [vmem:[%s3 + $0x30] sm:$0xff]
  %v230 = vld [vmem:[%s3 + $0x38] sm:$0xff]
  %v231 = vld [vmem:[%s3 + $0x40] sm:$0xff]
  %v232 = vld [vmem:[%s3 + $0x48] sm:$0xff]
  %v233 = vld [vmem:[%s3 + $0x50] sm:$0xff]
  %v234 = vld [vmem:[%s3 + $0x58] sm:$0xff]
  %v235 = vld [vmem:[%s3 + $0x60] sm:$0xff]
  %v236 = vld [vmem:[%s3 + $0x68] sm:$0xff]
  %v237 = vld [vmem:[%s3 + $0x70] sm:$0xff]
  %v238 = vld [vmem:[%s3 + $0x78] sm:$0xff]
  %v239 = vld [vmem:[%s3 + $0x80] sm:$0xff]
  %v240 = vld [vmem:[%s3 + $0x88] sm:$0xff]
  %v241 = vld [vmem:[%s3 + $0x90] sm:$0xff]
  %v242 = vld [vmem:[%s3 + $0x98] sm:$0xff]
  %v243 = vld [vmem:[%s3 + $0xa0] sm:$0xff]
  %v244 = vld [vmem:[%s3 + $0xa8] sm:$0xff]
  %v245 = vld [vmem:[%s3 + $0xb0] sm:$0xff]
  %v246 = vld [vmem:[%s3 + $0xb8] sm:$0xff]
  %v247 = vld [vmem:[%s3 + $0xc0] sm:$0xff]
  %v248 = vld [vmem:[%s3 + $0xc8] sm:$0xff]
  %v249 = vld [vmem:[%s3 + $0xd0] sm:$0xff]
  %v250 = vld [vmem:[%s3 + $0xd8] sm:$0xff]
  %v251 = vld [vmem:[%s3 + $0xe0] sm:$0xff]
  %v252 = vld [vmem:[%s3 + $0xe8] sm:$0xff]
  %v253 = vld [vmem:[%s3 + $0xf0] sm:$0xff]
  %v254 = vld [vmem:[%s3 + $0xf8] sm:$0xff]
  %v255 = vld [vmem:[%s3 + $0x100] sm:$0xff]
  %v256 = vld [vmem:[%s3 + $0x108] sm:$0xff]
  %v257 = vld [vmem:[%s3 + $0x110] sm:$0xff]
  %v258 = vld [vmem:[%s3 + $0x118] sm:$0xff]
  %v259 = vld [vmem:[%s3 + $0x120] sm:$0xff]
  %v260 = vld [vmem:[%s3 + $0x128] sm:$0xff]
  %v261 = vld [vmem:[%s3 + $0x130] sm:$0xff]
  %v262 = vld [vmem:[%s3 + $0x138] sm:$0xff]
  %v263 = vld [vmem:[%s3 + $0x140] sm:$0xff]
  %v264 = vld [vmem:[%s3 + $0x148] sm:$0xff]
  %v265 = vld [vmem:[%s3 + $0x150] sm:$0xff]
  %v266 = vld [vmem:[%s3 + $0x158] sm:$0xff]
  %v267 = vld [vmem:[%s3 + $0x160] sm:$0xff]
  %v268 = vld [vmem:[%s3 + $0x168] sm:$0xff]
  %v269 = vld [vmem:[%s3 + $0x170] sm:$0xff]
  %v270 = vld [vmem:[%s3 + $0x178] sm:$0xff]
  %v271 = vld [vmem:[%s3 + $0x180] sm:$0xff]
  %v272 = vld [vmem:[%s3 + $0x188] sm:$0xff]
  %v273 = vld [vmem:[%s3 + $0x190] sm:$0xff]
  %v274 = vld [vmem:[%s3 + $0x198] sm:$0xff]
  %v275 = vld [vmem:[%s3 + $0x1a0] sm:$0xff]
  %v276 = vld [vmem:[%s3 + $0x1a8] sm:$0xff]
  %v277 = vld [vmem:[%s3 + $0x1b0] sm:$0xff]
  %v278 = vld [vmem:[%s3 + $0x1b8] sm:$0xff]
  %v279 = vld [vmem:[%s3 + $0x1c0] sm:$0xff]
  %v280 = vld [vmem:[%s3 + $0x1c8] sm:$0xff]
  %v281 = vld [vmem:[%s3 + $0x1d0] sm:$0xff]
  %v282 = vld [vmem:[%s3 + $0x1d8] sm:$0xff]
  %v283 = vld [vmem:[%s3 + $0x1e0] sm:$0xff]
  %v284 = vld [vmem:[%s3 + $0x1e8] sm:$0xff]
  %v285 = vld [vmem:[%s3 + $0x1f0] sm:$0xff]
  %v286 = vld [vmem:[%s3 + $0x1f8] sm:$0xff]
  %v287 = vld [vmem:[%s3 + $0x200] sm:$0xff]
  %v288 = vld [vmem:[%s3 + $0x208] sm:$0xff]
  %v289 = vld [vmem:[%s3 + $0x210] sm:$0xff]
  %v290 = vld [vmem:[%s3 + $0x218] sm:$0xff]
  %v291 = vld [vmem:[%s3 + $0x220] sm:$0xff]
  %v292 = vld [vmem:[%s3 + $0x228] sm:$0xff]
  %v293 = vld [vmem:[%s3 + $0x230] sm:$0xff]
  %v294 = vld [vmem:[%s3 + $0x238] sm:$0xff]
  %v295 = vld [vmem:[%s3 + $0x240] sm:$0xff]
  %v296 = vld [vmem:[%s3 + $0x248] sm:$0xff]
  %v297 = vld [vmem:[%s3 + $0x250] sm:$0xff]
  %v298 = vld [vmem:[%s3 + $0x258] sm:$0xff]
  %v299 = vld [vmem:[%s3 + $0x260] sm:$0xff]
  %v300 = vld [vmem:[%s3 + $0x268] sm:$0xff]
  %v301 = vld [vmem:[%s3 + $0x270] sm:$0xff]
  %v302 = vld [vmem:[%s3 + $0x278] sm:$0xff]
  %v303 = vld [vmem:[%s3 + $0x280] sm:$0xff]
  %v304 = vld [vmem:[%s3 + $0x288] sm:$0xff]
  %v305 = vld [vmem:[%s3 + $0x290] sm:$0xff]
  %v306 = vld [vmem:[%s3 + $0x298] sm:$0xff]
  %v307 = vld [vmem:[%s3 + $0x2a0] sm:$0xff]
  %v308 = vld [vmem:[%s3 + $0x2a8] sm:$0xff]
  %v309 = vld [vmem:[%s3 + $0x2b0] sm:$0xff]
  %v310 = vld [vmem:[%s3 + $0x2b8] sm:$0xff]
  %v311 = vld [vmem:[%s3 + $0x2c0] sm:$0xff]
  %v312 = vld [vmem:[%s3 + $0x2c8] sm:$0xff]
  %v313 = vld [vmem:[%s3 + $0x2d0] sm:$0xff]
  %v314 = vld [vmem:[%s3 + $0x2d8] sm:$0xff]
  %v315 = vld [vmem:[%s3 + $0x2e0] sm:$0xff]
  %v316 = vld [vmem:[%s3 + $0x2e8] sm:$0xff]
  %v317 = vld [vmem:[%s3 + $0x2f0] sm:$0xff]
  %v318 = vld [vmem:[%s3 + $0x2f8] sm:$0xff]
  %v319 = vld [vmem:[%s3 + $0x300] sm:$0xff]
  %v320 = vld [vmem:[%s3 + $0x308] sm:$0xff]
  %v321 = vld [vmem:[%s3 + $0x310] sm:$0xff]
  %v322 = vld [vmem:[%s3 + $0x318] sm:$0xff]
  %v323 = vld [vmem:[%s3 + $0x320] sm:$0xff]
  %v324 = vld [vmem:[%s3 + $0x328] sm:$0xff]
  %v325 = vld [vmem:[%s3 + $0x330] sm:$0xff]
  %v326 = vld [vmem:[%s3 + $0x338] sm:$0xff]
  %v327 = vld [vmem:[%s3 + $0x340] sm:$0xff]
  %v328 = vld [vmem:[%s3 + $0x348] sm:$0xff]
  %v329 = vld [vmem:[%s3 + $0x350] sm:$0xff]
  %v330 = vld [vmem:[%s3 + $0x358] sm:$0xff]
  %v331 = vld [vmem:[%s3 + $0x360] sm:$0xff]
  %v332 = vld [vmem:[%s3 + $0x368] sm:$0xff]
  %v333 = vld [vmem:[%s3 + $0x370] sm:$0xff]
  %v334 = vld [vmem:[%s3 + $0x378] sm:$0xff]
  %v335 = vld [vmem:[%s3 + $0x380] sm:$0xff]
  %v336 = vld [vmem:[%s3 + $0x388] sm:$0xff]
  %v337 = vld [vmem:[%s3 + $0x390] sm:$0xff]
  %v338 = vld [vmem:[%s3 + $0x398] sm:$0xff]
  %v339 = vld [vmem:[%s3 + $0x3a0] sm:$0xff]
  %v340 = vld [vmem:[%s3 + $0x3a8] sm:$0xff]
  %v341 = vld [vmem:[%s3 + $0x3b0] sm:$0xff]
  %v342 = vld [vmem:[%s3 + $0x3b8] sm:$0xff]
  %v343 = vld [vmem:[%s3 + $0x3c0] sm:$0xff]
  %v344 = vld [vmem:[%s3 + $0x3c8] sm:$0xff]
  %v345 = vld [vmem:[%s3 + $0x3d0] sm:$0xff]
  %v346 = vld [vmem:[%s3 + $0x3d8] sm:$0xff]
  %v347 = vld [vmem:[%s3 + $0x3e0] sm:$0xff]
  %v348 = vld [vmem:[%s3 + $0x3e8] sm:$0xff]
  %v349 = vld [vmem:[%s3 + $0x3f0] sm:$0xff]
  %v350 = vld [vmem:[%s3 + $0x3f8] sm:$0xff]
  %v351 = vld [vmem:[%s5] sm:$0xf]
  %v352 = vld [vmem:[%s5 + $0x4] sm:$0xf]
  %v353 = vld [vmem:[%s5 + $0x8] sm:$0xf]
  %v354 = vld [vmem:[%s5 + $0xc] sm:$0xf]
  %v355 = vld [vmem:[%s5 + $0x10] sm:$0xf]
  %v356 = vld [vmem:[%s5 + $0x14] sm:$0xf]
  %v357 = vld [vmem:[%s5 + $0x18] sm:$0xf]
  %v358 = vld [vmem:[%s5 + $0x1c] sm:$0xf]
  %v359 = vld [vmem:[%s5 + $0x20] sm:$0xf]
  %v360 = vld [vmem:[%s5 + $0x24] sm:$0xf]
  %v361 = vld [vmem:[%s5 + $0x28] sm:$0xf]
  %v362 = vld [vmem:[%s5 + $0x2c] sm:$0xf]
  %v363 = vld [vmem:[%s5 + $0x30] sm:$0xf]
  %v364 = vld [vmem:[%s5 + $0x34] sm:$0xf]
  %v365 = vld [vmem:[%s5 + $0x38] sm:$0xf]
  %v366 = vld [vmem:[%s5 + $0x3c] sm:$0xf]
  %v367 = vld [vmem:[%s5 + $0x40] sm:$0xf]
  %v368 = vld [vmem:[%s5 + $0x44] sm:$0xf]
  %v369 = vld [vmem:[%s5 + $0x48] sm:$0xf]
  %v370 = vld [vmem:[%s5 + $0x4c] sm:$0xf]
  %v371 = vld [vmem:[%s5 + $0x50] sm:$0xf]
  %v372 = vld [vmem:[%s5 + $0x54] sm:$0xf]
  %v373 = vld [vmem:[%s5 + $0x58] sm:$0xf]
  %v374 = vld [vmem:[%s5 + $0x5c] sm:$0xf]
  %v375 = vld [vmem:[%s5 + $0x60] sm:$0xf]
  %v376 = vld [vmem:[%s5 + $0x64] sm:$0xf]
  %v377 = vld [vmem:[%s5 + $0x68] sm:$0xf]
  %v378 = vld [vmem:[%s5 + $0x6c] sm:$0xf]
  %v379 = vld [vmem:[%s5 + $0x70] sm:$0xf]
  %v380 = vld [vmem:[%s5 + $0x74] sm:$0xf]
  %v381 = vld [vmem:[%s5 + $0x78] sm:$0xf]
  %v382 = vld [vmem:[%s5 + $0x7c] sm:$0xf]
  %v383 = vld [vmem:[%s5 + $0x80] sm:$0xf]
  %v384 = vld [vmem:[%s5 + $0x84] sm:$0xf]
  %v385 = vld [vmem:[%s5 + $0x88] sm:$0xf]
  %v386 = vld [vmem:[%s5 + $0x8c] sm:$0xf]
  %v387 = vld [vmem:[%s5 + $0x90] sm:$0xf]
  %v388 = vld [vmem:[%s5 + $0x94] sm:$0xf]
  %v389 = vld [vmem:[%s5 + $0x98] sm:$0xf]
  %v390 = vld [vmem:[%s5 + $0x9c] sm:$0xf]
  %v391 = vld [vmem:[%s5 + $0xa0] sm:$0xf]
  %v392 = vld [vmem:[%s5 + $0xa4] sm:$0xf]
  %v393 = vld [vmem:[%s5 + $0xa8] sm:$0xf]
  %v394 = vld [vmem:[%s5 + $0xac] sm:$0xf]
  %v395 = vld [vmem:[%s5 + $0xb0] sm:$0xf]
  %v396 = vld [vmem:[%s5 + $0xb4] sm:$0xf]
  %v397 = vld [vmem:[%s5 + $0xb8] sm:$0xf]
  %v398 = vld [vmem:[%s5 + $0xbc] sm:$0xf]
  %v399 = vld [vmem:[%s5 + $0xc0] sm:$0xf]
  %v400 = vld [vmem:[%s5 + $0xc4] sm:$0xf]
  %v401 = vld [vmem:[%s5 + $0xc8] sm:$0xf]
  %v402 = vld [vmem:[%s5 + $0xcc] sm:$0xf]
  %v403 = vld [vmem:[%s5 + $0xd0] sm:$0xf]
  %v404 = vld [vmem:[%s5 + $0xd4] sm:$0xf]
  %v405 = vld [vmem:[%s5 + $0xd8] sm:$0xf]
  %v406 = vld [vmem:[%s5 + $0xdc] sm:$0xf]
  %v407 = vld [vmem:[%s5 + $0xe0] sm:$0xf]
  %v408 = vld [vmem:[%s5 + $0xe4] sm:$0xf]
  %v409 = vld [vmem:[%s5 + $0xe8] sm:$0xf]
  %v410 = vld [vmem:[%s5 + $0xec] sm:$0xf]
  %v411 = vld [vmem:[%s5 + $0xf0] sm:$0xf]
  %v412 = vld [vmem:[%s5 + $0xf4] sm:$0xf]
  %v413 = vld [vmem:[%s5 + $0xf8] sm:$0xf]
  %v414 = vld [vmem:[%s5 + $0xfc] sm:$0xf]
  %v415 = vld [vmem:[%s2] sm:$0xf]
  %v416 = vld [vmem:[%s4] sm:$0xf]
  %v417 = vld [vmem:[%s6] sm:$0x1]
  %v418 = vld [vmem:[%s0] sm:$0xff]
  %v419 = vld [vmem:[%s0 + $0x8] sm:$0xff]
  %v420 = vld [vmem:[%s0 + $0x10] sm:$0xff]
  %v421 = vld [vmem:[%s0 + $0x18] sm:$0xff]
  %v422 = vld [vmem:[%s0 + $0x20] sm:$0xff]
  %v423 = vld [vmem:[%s0 + $0x28] sm:$0xff]
  %v424 = vld [vmem:[%s0 + $0x30] sm:$0xff]
  %v425 = vld [vmem:[%s0 + $0x38] sm:$0xff]
  %v426 = vld [vmem:[%s0 + $0x40] sm:$0xff]
  %v427 = vld [vmem:[%s0 + $0x48] sm:$0xff]
  %v428 = vld [vmem:[%s0 + $0x50] sm:$0xff]
  %v429 = vld [vmem:[%s0 + $0x58] sm:$0xff]
  %v430 = vld [vmem:[%s0 + $0x60] sm:$0xff]
  %v431 = vld [vmem:[%s0 + $0x68] sm:$0xff]
  %v432 = vld [vmem:[%s0 + $0x70] sm:$0xff]
  %v433 = vld [vmem:[%s0 + $0x78] sm:$0xff]
  %v434 = vld [vmem:[%s0 + $0x80] sm:$0xff]
  %v435 = vld [vmem:[%s0 + $0x88] sm:$0xff]
  %v436 = vld [vmem:[%s0 + $0x90] sm:$0xff]
  %v437 = vld [vmem:[%s0 + $0x98] sm:$0xff]
  %v438 = vld [vmem:[%s0 + $0xa0] sm:$0xff]
  %v439 = vld [vmem:[%s0 + $0xa8] sm:$0xff]
  %v440 = vld [vmem:[%s0 + $0xb0] sm:$0xff]
  %v441 = vld [vmem:[%s0 + $0xb8] sm:$0xff]
  %v442 = vld [vmem:[%s0 + $0xc0] sm:$0xff]
  %v443 = vld [vmem:[%s0 + $0xc8] sm:$0xff]
  %v444 = vld [vmem:[%s0 + $0xd0] sm:$0xff]
  %v445 = vld [vmem:[%s0 + $0xd8] sm:$0xff]
  %v446 = vpack.c.bf16 %v425, %v418
  %v447 = vpack.c.bf16 %v426, %v419
  %v448 = vpack.c.bf16 %v427, %v420
  %v449 = vpack.c.bf16 %v428, %v421
  %v450 = vpack.c.bf16 %v429, %v422
  %v451 = vpack.c.bf16 %v430, %v423
  %v452 = vpack.c.bf16 %v431, %v424
  %v453 = vpack.c.bf16 %v439, %v432
  %v454 = vpack.c.bf16 %v440, %v433
  %v455 = vpack.c.bf16 %v441, %v434
  %v456 = vpack.c.bf16 %v442, %v435
  %v457 = vpack.c.bf16 %v443, %v436
  %v458 = vpack.c.bf16 %v444, %v437
  %v459 = vpack.c.bf16 %v445, %v438
  %v461 = vlaneseq
  %v462 = vshrl.u32 %v461, 7
  %v463 = vsub.s32 0, %v462
  %v464 = vrot.slane %v415, %v463
  %v465 = vlaneseq
  %v466 = vshrl.u32 %v465, 7
  %v467 = vsub.s32 1, %v466
  %v468 = vrot.slane %v415, %v467
  %v469 = vlaneseq
  %v470 = vshrl.u32 %v469, 7
  %v471 = vsub.s32 2, %v470
  %v472 = vrot.slane %v415, %v471
  %v473 = vlaneseq
  %v474 = vshrl.u32 %v473, 7
  %v475 = vsub.s32 3, %v474
  %v476 = vrot.slane %v415, %v475
  %v677 = vunpack.c.l.b16 %v27
  %v678 = vunpack.c.h.b16 %v27
  %v679 = vunpack.c.l.b16 %v28
  %v680 = vunpack.c.h.b16 %v28
  %v681 = vunpack.c.l.b16 %v29
  %v682 = vunpack.c.h.b16 %v29
  %v683 = vunpack.c.l.b16 %v30
  %v684 = vunpack.c.h.b16 %v30
  %v685 = vunpack.c.l.b16 %v31
  %v686 = vunpack.c.h.b16 %v31
  %v687 = vunpack.c.l.b16 %v32
  %v688 = vunpack.c.h.b16 %v32
  %v689 = vunpack.c.l.b16 %v33
  %v690 = vunpack.c.h.b16 %v33
  %v691 = vunpack.c.l.b16 %v34
  %v692 = vunpack.c.h.b16 %v34
  %v693 = vunpack.c.l.b16 %v35
  %v694 = vunpack.c.h.b16 %v35
  %v695 = vunpack.c.l.b16 %v36
  %v696 = vunpack.c.h.b16 %v36
  %v697 = vunpack.c.l.b16 %v37
  %v698 = vunpack.c.h.b16 %v37
  %v699 = vunpack.c.l.b16 %v38
  %v700 = vunpack.c.h.b16 %v38
  %v701 = vunpack.c.l.b16 %v39
  %v702 = vunpack.c.h.b16 %v39
  %v703 = vunpack.c.l.b16 %v40
  %v704 = vunpack.c.h.b16 %v40
  %v705 = vunpack.c.l.b16 %v41
  %v706 = vunpack.c.h.b16 %v41
  %v707 = vunpack.c.l.b16 %v42
  %v708 = vunpack.c.h.b16 %v42
  %v709 = vunpack.c.l.b16 %v43
  %v710 = vunpack.c.h.b16 %v43
  %v711 = vunpack.c.l.b16 %v44
  %v712 = vunpack.c.h.b16 %v44
  %v713 = vunpack.c.l.b16 %v45
  %v714 = vunpack.c.h.b16 %v45
  %v715 = vunpack.c.l.b16 %v46
  %v716 = vunpack.c.h.b16 %v46
  %v717 = vunpack.c.l.b16 %v47
  %v718 = vunpack.c.h.b16 %v47
  %v719 = vunpack.c.l.b16 %v48
  %v720 = vunpack.c.h.b16 %v48
  %v721 = vunpack.c.l.b16 %v49
  %v722 = vunpack.c.h.b16 %v49
  %v723 = vunpack.c.l.b16 %v50
  %v724 = vunpack.c.h.b16 %v50
  %v725 = vunpack.c.l.b16 %v51
  %v726 = vunpack.c.h.b16 %v51
  %v727 = vunpack.c.l.b16 %v52
  %v728 = vunpack.c.h.b16 %v52
  %v729 = vunpack.c.l.b16 %v53
  %v730 = vunpack.c.h.b16 %v53
  %v731 = vunpack.c.l.b16 %v54
  %v732 = vunpack.c.h.b16 %v54
  %v733 = vunpack.c.l.b16 %v55
  %v734 = vunpack.c.h.b16 %v55
  %v735 = vunpack.c.l.b16 %v56
  %v736 = vunpack.c.h.b16 %v56
  %v737 = vunpack.c.l.b16 %v57
  %v738 = vunpack.c.h.b16 %v57
  %v739 = vunpack.c.l.b16 %v58
  %v740 = vunpack.c.h.b16 %v58
  %v741 = vunpack.c.l.b16 %v59
  %v742 = vunpack.c.h.b16 %v59
  %v743 = vunpack.c.l.b16 %v60
  %v744 = vunpack.c.h.b16 %v60
  %v745 = vunpack.c.l.b16 %v61
  %v746 = vunpack.c.h.b16 %v61
  %v747 = vunpack.c.l.b16 %v62
  %v748 = vunpack.c.h.b16 %v62
  %v749 = vunpack.c.l.b16 %v63
  %v750 = vunpack.c.h.b16 %v63
  %v751 = vunpack.c.l.b16 %v64
  %v752 = vunpack.c.h.b16 %v64
  %v753 = vunpack.c.l.b16 %v65
  %v754 = vunpack.c.h.b16 %v65
  %v755 = vunpack.c.l.b16 %v66
  %v756 = vunpack.c.h.b16 %v66
  %v757 = vunpack.c.l.b16 %v67
  %v758 = vunpack.c.h.b16 %v67
  %v759 = vunpack.c.l.b16 %v68
  %v760 = vunpack.c.h.b16 %v68
  %v761 = vunpack.c.l.b16 %v69
  %v762 = vunpack.c.h.b16 %v69
  %v763 = vunpack.c.l.b16 %v70
  %v764 = vunpack.c.h.b16 %v70
  %v765 = vunpack.c.l.b16 %v71
  %v766 = vunpack.c.h.b16 %v71
  %v767 = vunpack.c.l.b16 %v72
  %v768 = vunpack.c.h.b16 %v72
  %v769 = vunpack.c.l.b16 %v73
  %v770 = vunpack.c.h.b16 %v73
  %v771 = vunpack.c.l.b16 %v74
  %v772 = vunpack.c.h.b16 %v74
  %v773 = vunpack.c.l.b16 %v75
  %v774 = vunpack.c.h.b16 %v75
  %v775 = vunpack.c.l.b16 %v76
  %v776 = vunpack.c.h.b16 %v76
  %v777 = vunpack.c.l.b16 %v77
  %v778 = vunpack.c.h.b16 %v77
  %v779 = vunpack.c.l.b16 %v78
  %v780 = vunpack.c.h.b16 %v78
  %v781 = vunpack.c.l.b16 %v79
  %v782 = vunpack.c.h.b16 %v79
  %v783 = vunpack.c.l.b16 %v80
  %v784 = vunpack.c.h.b16 %v80
  %v785 = vunpack.c.l.b16 %v81
  %v786 = vunpack.c.h.b16 %v81
  %v787 = vunpack.c.l.b16 %v82
  %v788 = vunpack.c.h.b16 %v82
  %v789 = vunpack.c.l.b16 %v83
  %v790 = vunpack.c.h.b16 %v83
  %v791 = vunpack.c.l.b16 %v84
  %v792 = vunpack.c.h.b16 %v84
  %v793 = vunpack.c.l.b16 %v85
  %v794 = vunpack.c.h.b16 %v85
  %v795 = vunpack.c.l.b16 %v86
  %v796 = vunpack.c.h.b16 %v86
  %v797 = vunpack.c.l.b16 %v87
  %v798 = vunpack.c.h.b16 %v87
  %v799 = vunpack.c.l.b16 %v88
  %v800 = vunpack.c.h.b16 %v88
  %v801 = vunpack.c.l.b16 %v89
  %v802 = vunpack.c.h.b16 %v89
  %v803 = vunpack.c.l.b16 %v90
  %v804 = vunpack.c.h.b16 %v90
  %v805 = vunpack.c.l.b16 %v91
  %v806 = vunpack.c.h.b16 %v91
  %v807 = vunpack.c.l.b16 %v92
  %v808 = vunpack.c.h.b16 %v92
  %v809 = vunpack.c.l.b16 %v93
  %v810 = vunpack.c.h.b16 %v93
  %v811 = vunpack.c.l.b16 %v94
  %v812 = vunpack.c.h.b16 %v94
  %v813 = vunpack.c.l.b16 %v95
  %v814 = vunpack.c.h.b16 %v95
  %v815 = vunpack.c.l.b16 %v96
  %v816 = vunpack.c.h.b16 %v96
  %v817 = vunpack.c.l.b16 %v97
  %v818 = vunpack.c.h.b16 %v97
  %v819 = vunpack.c.l.b16 %v98
  %v820 = vunpack.c.h.b16 %v98
  %v821 = vunpack.c.l.b16 %v99
  %v822 = vunpack.c.h.b16 %v99
  %v823 = vunpack.c.l.b16 %v100
  %v824 = vunpack.c.h.b16 %v100
  %v825 = vunpack.c.l.b16 %v101
  %v826 = vunpack.c.h.b16 %v101
  %v827 = vunpack.c.l.b16 %v102
  %v828 = vunpack.c.h.b16 %v102
  %v829 = vunpack.c.l.b16 %v103
  %v830 = vunpack.c.h.b16 %v103
  %v831 = vunpack.c.l.b16 %v104
  %v832 = vunpack.c.h.b16 %v104
  %v833 = vunpack.c.l.b16 %v105
  %v834 = vunpack.c.h.b16 %v105
  %v835 = vunpack.c.l.b16 %v106
  %v836 = vunpack.c.h.b16 %v106
  %v837 = vunpack.c.l.b16 %v107
  %v838 = vunpack.c.h.b16 %v107
  %v839 = vunpack.c.l.b16 %v108
  %v840 = vunpack.c.h.b16 %v108
  %v841 = vunpack.c.l.b16 %v109
  %v842 = vunpack.c.h.b16 %v109
  %v843 = vunpack.c.l.b16 %v110
  %v844 = vunpack.c.h.b16 %v110
  %v845 = vunpack.c.l.b16 %v111
  %v846 = vunpack.c.h.b16 %v111
  %v847 = vunpack.c.l.b16 %v112
  %v848 = vunpack.c.h.b16 %v112
  %v849 = vunpack.c.l.b16 %v113
  %v850 = vunpack.c.h.b16 %v113
  %v851 = vunpack.c.l.b16 %v114
  %v852 = vunpack.c.h.b16 %v114
  %v853 = vunpack.c.l.b16 %v115
  %v854 = vunpack.c.h.b16 %v115
  %v855 = vunpack.c.l.b16 %v116
  %v856 = vunpack.c.h.b16 %v116
  %v857 = vunpack.c.l.b16 %v117
  %v858 = vunpack.c.h.b16 %v117
  %v859 = vunpack.c.l.b16 %v118
  %v860 = vunpack.c.h.b16 %v118
  %v861 = vunpack.c.l.b16 %v119
  %v862 = vunpack.c.h.b16 %v119
  %v863 = vunpack.c.l.b16 %v120
  %v864 = vunpack.c.h.b16 %v120
  %v865 = vunpack.c.l.b16 %v121
  %v866 = vunpack.c.h.b16 %v121
  %v867 = vunpack.c.l.b16 %v122
  %v868 = vunpack.c.h.b16 %v122
  %v869 = vunpack.c.l.b16 %v123
  %v870 = vunpack.c.h.b16 %v123
  %v871 = vunpack.c.l.b16 %v124
  %v872 = vunpack.c.h.b16 %v124
  %v873 = vunpack.c.l.b16 %v125
  %v874 = vunpack.c.h.b16 %v125
  %v875 = vunpack.c.l.b16 %v126
  %v876 = vunpack.c.h.b16 %v126
  %v877 = vunpack.c.l.b16 %v127
  %v878 = vunpack.c.h.b16 %v127
  %v879 = vunpack.c.l.b16 %v128
  %v880 = vunpack.c.h.b16 %v128
  %v881 = vunpack.c.l.b16 %v129
  %v882 = vunpack.c.h.b16 %v129
  %v883 = vunpack.c.l.b16 %v130
  %v884 = vunpack.c.h.b16 %v130
  %v885 = vunpack.c.l.b16 %v131
  %v886 = vunpack.c.h.b16 %v131
  %v887 = vunpack.c.l.b16 %v132
  %v888 = vunpack.c.h.b16 %v132
  %v889 = vunpack.c.l.b16 %v133
  %v890 = vunpack.c.h.b16 %v133
  %v891 = vunpack.c.l.b16 %v134
  %v892 = vunpack.c.h.b16 %v134
  %v893 = vunpack.c.l.b16 %v135
  %v894 = vunpack.c.h.b16 %v135
  %v895 = vunpack.c.l.b16 %v136
  %v896 = vunpack.c.h.b16 %v136
  %v897 = vunpack.c.l.b16 %v137
  %v898 = vunpack.c.h.b16 %v137
  %v899 = vunpack.c.l.b16 %v138
  %v900 = vunpack.c.h.b16 %v138
  %v901 = vunpack.c.l.b16 %v139
  %v902 = vunpack.c.h.b16 %v139
  %v903 = vunpack.c.l.b16 %v140
  %v904 = vunpack.c.h.b16 %v140
  %v905 = vunpack.c.l.b16 %v141
  %v906 = vunpack.c.h.b16 %v141
  %v907 = vunpack.c.l.b16 %v142
  %v908 = vunpack.c.h.b16 %v142
  %v909 = vunpack.c.l.b16 %v143
  %v910 = vunpack.c.h.b16 %v143
  %v911 = vunpack.c.l.b16 %v144
  %v912 = vunpack.c.h.b16 %v144
  %v913 = vunpack.c.l.b16 %v145
  %v914 = vunpack.c.h.b16 %v145
  %v915 = vunpack.c.l.b16 %v146
  %v916 = vunpack.c.h.b16 %v146
  %v917 = vunpack.c.l.b16 %v147
  %v918 = vunpack.c.h.b16 %v147
  %v919 = vunpack.c.l.b16 %v148
  %v920 = vunpack.c.h.b16 %v148
  %v921 = vunpack.c.l.b16 %v149
  %v922 = vunpack.c.h.b16 %v149
  %v923 = vunpack.c.l.b16 %v150
  %v924 = vunpack.c.h.b16 %v150
  %v925 = vunpack.c.l.b16 %v151
  %v926 = vunpack.c.h.b16 %v151
  %v927 = vunpack.c.l.b16 %v152
  %v928 = vunpack.c.h.b16 %v152
  %v929 = vunpack.c.l.b16 %v153
  %v930 = vunpack.c.h.b16 %v153
  %v931 = vunpack.c.l.b16 %v154
  %v932 = vunpack.c.h.b16 %v154
  %v933 = vunpack.c.l.b16 %v155
  %v934 = vunpack.c.h.b16 %v155
  %v935 = vunpack.c.l.b16 %v156
  %v936 = vunpack.c.h.b16 %v156
  %v937 = vunpack.c.l.b16 %v157
  %v938 = vunpack.c.h.b16 %v157
  %v939 = vunpack.c.l.b16 %v158
  %v940 = vunpack.c.h.b16 %v158
  %v941 = vunpack.c.l.b16 %v159
  %v942 = vunpack.c.h.b16 %v159
  %v943 = vunpack.c.l.b16 %v160
  %v944 = vunpack.c.h.b16 %v160
  %v945 = vunpack.c.l.b16 %v161
  %v946 = vunpack.c.h.b16 %v161
  %v947 = vunpack.c.l.b16 %v162
  %v948 = vunpack.c.h.b16 %v162
  %v949 = vunpack.c.l.b16 %v163
  %v950 = vunpack.c.h.b16 %v163
  %v951 = vunpack.c.l.b16 %v164
  %v952 = vunpack.c.h.b16 %v164
  %v953 = vunpack.c.l.b16 %v165
  %v954 = vunpack.c.h.b16 %v165
  %v955 = vunpack.c.l.b16 %v166
  %v956 = vunpack.c.h.b16 %v166
  %v957 = vunpack.c.l.b16 %v167
  %v958 = vunpack.c.h.b16 %v167
  %v959 = vunpack.c.l.b16 %v168
  %v960 = vunpack.c.h.b16 %v168
  %v961 = vunpack.c.l.b16 %v169
  %v962 = vunpack.c.h.b16 %v169
  %v963 = vunpack.c.l.b16 %v170
  %v964 = vunpack.c.h.b16 %v170
  %v965 = vunpack.c.l.b16 %v171
  %v966 = vunpack.c.h.b16 %v171
  %v967 = vunpack.c.l.b16 %v172
  %v968 = vunpack.c.h.b16 %v172
  %v969 = vunpack.c.l.b16 %v173
  %v970 = vunpack.c.h.b16 %v173
  %v971 = vunpack.c.l.b16 %v174
  %v972 = vunpack.c.h.b16 %v174
  %v973 = vunpack.c.l.b16 %v175
  %v974 = vunpack.c.h.b16 %v175
  %v975 = vunpack.c.l.b16 %v176
  %v976 = vunpack.c.h.b16 %v176
  %v977 = vunpack.c.l.b16 %v177
  %v978 = vunpack.c.h.b16 %v177
  %v979 = vunpack.c.l.b16 %v178
  %v980 = vunpack.c.h.b16 %v178
  %v981 = vunpack.c.l.b16 %v179
  %v982 = vunpack.c.h.b16 %v179
  %v983 = vunpack.c.l.b16 %v180
  %v984 = vunpack.c.h.b16 %v180
  %v985 = vunpack.c.l.b16 %v181
  %v986 = vunpack.c.h.b16 %v181
  %v987 = vunpack.c.l.b16 %v182
  %v988 = vunpack.c.h.b16 %v182
  %v989 = vunpack.c.l.b16 %v183
  %v990 = vunpack.c.h.b16 %v183
  %v991 = vunpack.c.l.b16 %v184
  %v992 = vunpack.c.h.b16 %v184
  %v993 = vunpack.c.l.b16 %v185
  %v994 = vunpack.c.h.b16 %v185
  %v995 = vunpack.c.l.b16 %v186
  %v996 = vunpack.c.h.b16 %v186
  %v997 = vunpack.c.l.b16 %v187
  %v998 = vunpack.c.h.b16 %v187
  %v999 = vunpack.c.l.b16 %v188
  %v1000 = vunpack.c.h.b16 %v188
  %v1001 = vunpack.c.l.b16 %v189
  %v1002 = vunpack.c.h.b16 %v189
  %v1003 = vunpack.c.l.b16 %v190
  %v1004 = vunpack.c.h.b16 %v190
  %v1005 = vunpack.c.l.b16 %v191
  %v1006 = vunpack.c.h.b16 %v191
  %v1007 = vunpack.c.l.b16 %v192
  %v1008 = vunpack.c.h.b16 %v192
  %v1009 = vunpack.c.l.b16 %v193
  %v1010 = vunpack.c.h.b16 %v193
  %v1011 = vunpack.c.l.b16 %v194
  %v1012 = vunpack.c.h.b16 %v194
  %v1013 = vunpack.c.l.b16 %v195
  %v1014 = vunpack.c.h.b16 %v195
  %v1015 = vunpack.c.l.b16 %v196
  %v1016 = vunpack.c.h.b16 %v196
  %v1017 = vunpack.c.l.b16 %v197
  %v1018 = vunpack.c.h.b16 %v197
  %v1019 = vunpack.c.l.b16 %v198
  %v1020 = vunpack.c.h.b16 %v198
  %v1021 = vunpack.c.l.b16 %v199
  %v1022 = vunpack.c.h.b16 %v199
  %v1023 = vunpack.c.l.b16 %v200
  %v1024 = vunpack.c.h.b16 %v200
  %v1025 = vunpack.c.l.b16 %v201
  %v1026 = vunpack.c.h.b16 %v201
  %v1027 = vunpack.c.l.b16 %v202
  %v1028 = vunpack.c.h.b16 %v202
  %v1029 = vunpack.c.l.b16 %v203
  %v1030 = vunpack.c.h.b16 %v203
  %v1031 = vunpack.c.l.b16 %v204
  %v1032 = vunpack.c.h.b16 %v204
  %v1033 = vunpack.c.l.b16 %v205
  %v1034 = vunpack.c.h.b16 %v205
  %v1035 = vunpack.c.l.b16 %v206
  %v1036 = vunpack.c.h.b16 %v206
  %v1037 = vunpack.c.l.b16 %v207
  %v1038 = vunpack.c.h.b16 %v207
  %v1039 = vunpack.c.l.b16 %v208
  %v1040 = vunpack.c.h.b16 %v208
  %v1041 = vunpack.c.l.b16 %v209
  %v1042 = vunpack.c.h.b16 %v209
  %v1043 = vunpack.c.l.b16 %v210
  %v1044 = vunpack.c.h.b16 %v210
  %v1045 = vunpack.c.l.b16 %v211
  %v1046 = vunpack.c.h.b16 %v211
  %v1047 = vunpack.c.l.b16 %v212
  %v1048 = vunpack.c.h.b16 %v212
  %v1049 = vunpack.c.l.b16 %v213
  %v1050 = vunpack.c.h.b16 %v213
  %v1051 = vunpack.c.l.b16 %v214
  %v1052 = vunpack.c.h.b16 %v214
  %v1053 = vunpack.c.l.b16 %v215
  %v1054 = vunpack.c.h.b16 %v215
  %v1055 = vunpack.c.l.b16 %v216
  %v1056 = vunpack.c.h.b16 %v216
  %v1057 = vunpack.c.l.b16 %v217
  %v1058 = vunpack.c.h.b16 %v217
  %v1059 = vunpack.c.l.b16 %v218
  %v1060 = vunpack.c.h.b16 %v218
  %v1061 = vunpack.c.l.b16 %v219
  %v1062 = vunpack.c.h.b16 %v219
  %v1063 = vunpack.c.l.b16 %v220
  %v1064 = vunpack.c.h.b16 %v220
  %v1065 = vunpack.c.l.b16 %v221
  %v1066 = vunpack.c.h.b16 %v221
  %v1067 = vunpack.c.l.b16 %v222
  %v1068 = vunpack.c.h.b16 %v222
  %v1069 = vpack.c.b16 %v681, %v677
  %v1070 = vpack.c.b16 %v682, %v678
  %v1071 = vpack.c.b16 %v683, %v679
  %v1072 = vpack.c.b16 %v684, %v680
  %v1073 = vpack.c.b16 %v689, %v685
  %v1074 = vpack.c.b16 %v690, %v686
  %v1075 = vpack.c.b16 %v691, %v687
  %v1076 = vpack.c.b16 %v692, %v688
  %v1077 = vpack.c.b16 %v697, %v693
  %v1078 = vpack.c.b16 %v698, %v694
  %v1079 = vpack.c.b16 %v699, %v695
  %v1080 = vpack.c.b16 %v700, %v696
  %v1081 = vpack.c.b16 %v705, %v701
  %v1082 = vpack.c.b16 %v706, %v702
  %v1083 = vpack.c.b16 %v707, %v703
  %v1084 = vpack.c.b16 %v708, %v704
  %v1085 = vpack.c.b16 %v713, %v709
  %v1086 = vpack.c.b16 %v714, %v710
  %v1087 = vpack.c.b16 %v715, %v711
  %v1088 = vpack.c.b16 %v716, %v712
  %v1089 = vpack.c.b16 %v721, %v717
  %v1090 = vpack.c.b16 %v722, %v718
  %v1091 = vpack.c.b16 %v723, %v719
  %v1092 = vpack.c.b16 %v724, %v720
  %v1093 = vpack.c.b16 %v729, %v725
  %v1094 = vpack.c.b16 %v730, %v726
  %v1095 = vpack.c.b16 %v731, %v727
  %v1096 = vpack.c.b16 %v732, %v728
  %v1097 = vpack.c.b16 %v737, %v733
  %v1098 = vpack.c.b16 %v738, %v734
  %v1099 = vpack.c.b16 %v739, %v735
  %v1100 = vpack.c.b16 %v740, %v736
  %v1101 = vpack.c.b16 %v745, %v741
  %v1102 = vpack.c.b16 %v746, %v742
  %v1103 = vpack.c.b16 %v747, %v743
  %v1104 = vpack.c.b16 %v748, %v744
  %v1105 = vpack.c.b16 %v753, %v749
  %v1106 = vpack.c.b16 %v754, %v750
  %v1107 = vpack.c.b16 %v755, %v751
  %v1108 = vpack.c.b16 %v756, %v752
  %v1109 = vpack.c.b16 %v761, %v757
  %v1110 = vpack.c.b16 %v762, %v758
  %v1111 = vpack.c.b16 %v763, %v759
  %v1112 = vpack.c.b16 %v764, %v760
  %v1113 = vpack.c.b16 %v769, %v765
  %v1114 = vpack.c.b16 %v770, %v766
  %v1115 = vpack.c.b16 %v771, %v767
  %v1116 = vpack.c.b16 %v772, %v768
  %v1117 = vpack.c.b16 %v777, %v773
  %v1118 = vpack.c.b16 %v778, %v774
  %v1119 = vpack.c.b16 %v779, %v775
  %v1120 = vpack.c.b16 %v780, %v776
  %v1121 = vpack.c.b16 %v785, %v781
  %v1122 = vpack.c.b16 %v786, %v782
  %v1123 = vpack.c.b16 %v787, %v783
  %v1124 = vpack.c.b16 %v788, %v784
  %v1125 = vpack.c.b16 %v793, %v789
  %v1126 = vpack.c.b16 %v794, %v790
  %v1127 = vpack.c.b16 %v795, %v791
  %v1128 = vpack.c.b16 %v796, %v792
  %v1129 = vpack.c.b16 %v801, %v797
  %v1130 = vpack.c.b16 %v802, %v798
  %v1131 = vpack.c.b16 %v803, %v799
  %v1132 = vpack.c.b16 %v804, %v800
  %v1133 = vpack.c.b16 %v809, %v805
  %v1134 = vpack.c.b16 %v810, %v806
  %v1135 = vpack.c.b16 %v811, %v807
  %v1136 = vpack.c.b16 %v812, %v808
  %v1137 = vpack.c.b16 %v817, %v813
  %v1138 = vpack.c.b16 %v818, %v814
  %v1139 = vpack.c.b16 %v819, %v815
  %v1140 = vpack.c.b16 %v820, %v816
  %v1141 = vpack.c.b16 %v825, %v821
  %v1142 = vpack.c.b16 %v826, %v822
  %v1143 = vpack.c.b16 %v827, %v823
  %v1144 = vpack.c.b16 %v828, %v824
  %v1145 = vpack.c.b16 %v833, %v829
  %v1146 = vpack.c.b16 %v834, %v830
  %v1147 = vpack.c.b16 %v835, %v831
  %v1148 = vpack.c.b16 %v836, %v832
  %v1149 = vpack.c.b16 %v841, %v837
  %v1150 = vpack.c.b16 %v842, %v838
  %v1151 = vpack.c.b16 %v843, %v839
  %v1152 = vpack.c.b16 %v844, %v840
  %v1153 = vpack.c.b16 %v849, %v845
  %v1154 = vpack.c.b16 %v850, %v846
  %v1155 = vpack.c.b16 %v851, %v847
  %v1156 = vpack.c.b16 %v852, %v848
  %v1157 = vpack.c.b16 %v857, %v853
  %v1158 = vpack.c.b16 %v858, %v854
  %v1159 = vpack.c.b16 %v859, %v855
  %v1160 = vpack.c.b16 %v860, %v856
  %v1161 = vpack.c.b16 %v865, %v861
  %v1162 = vpack.c.b16 %v866, %v862
  %v1163 = vpack.c.b16 %v867, %v863
  %v1164 = vpack.c.b16 %v868, %v864
  %v1165 = vpack.c.b16 %v873, %v869
  %v1166 = vpack.c.b16 %v874, %v870
  %v1167 = vpack.c.b16 %v875, %v871
  %v1168 = vpack.c.b16 %v876, %v872
  %v1169 = vpack.c.b16 %v881, %v877
  %v1170 = vpack.c.b16 %v882, %v878
  %v1171 = vpack.c.b16 %v883, %v879
  %v1172 = vpack.c.b16 %v884, %v880
  %v1173 = vpack.c.b16 %v889, %v885
  %v1174 = vpack.c.b16 %v890, %v886
  %v1175 = vpack.c.b16 %v891, %v887
  %v1176 = vpack.c.b16 %v892, %v888
  %v1177 = vpack.c.b16 %v897, %v893
  %v1178 = vpack.c.b16 %v898, %v894
  %v1179 = vpack.c.b16 %v899, %v895
  %v1180 = vpack.c.b16 %v900, %v896
  %v1181 = vpack.c.b16 %v905, %v901
  %v1182 = vpack.c.b16 %v906, %v902
  %v1183 = vpack.c.b16 %v907, %v903
  %v1184 = vpack.c.b16 %v908, %v904
  %v1185 = vpack.c.b16 %v913, %v909
  %v1186 = vpack.c.b16 %v914, %v910
  %v1187 = vpack.c.b16 %v915, %v911
  %v1188 = vpack.c.b16 %v916, %v912
  %v1189 = vpack.c.b16 %v921, %v917
  %v1190 = vpack.c.b16 %v922, %v918
  %v1191 = vpack.c.b16 %v923, %v919
  %v1192 = vpack.c.b16 %v924, %v920
  %v1193 = vpack.c.b16 %v929, %v925
  %v1194 = vpack.c.b16 %v930, %v926
  %v1195 = vpack.c.b16 %v931, %v927
  %v1196 = vpack.c.b16 %v932, %v928
  %v1197 = vpack.c.b16 %v937, %v933
  %v1198 = vpack.c.b16 %v938, %v934
  %v1199 = vpack.c.b16 %v939, %v935
  %v1200 = vpack.c.b16 %v940, %v936
  %v1201 = vpack.c.b16 %v945, %v941
  %v1202 = vpack.c.b16 %v946, %v942
  %v1203 = vpack.c.b16 %v947, %v943
  %v1204 = vpack.c.b16 %v948, %v944
  %v1205 = vpack.c.b16 %v953, %v949
  %v1206 = vpack.c.b16 %v954, %v950
  %v1207 = vpack.c.b16 %v955, %v951
  %v1208 = vpack.c.b16 %v956, %v952
  %v1209 = vpack.c.b16 %v961, %v957
  %v1210 = vpack.c.b16 %v962, %v958
  %v1211 = vpack.c.b16 %v963, %v959
  %v1212 = vpack.c.b16 %v964, %v960
  %v1213 = vpack.c.b16 %v969, %v965
  %v1214 = vpack.c.b16 %v970, %v966
  %v1215 = vpack.c.b16 %v971, %v967
  %v1216 = vpack.c.b16 %v972, %v968
  %v1217 = vpack.c.b16 %v977, %v973
  %v1218 = vpack.c.b16 %v978, %v974
  %v1219 = vpack.c.b16 %v979, %v975
  %v1220 = vpack.c.b16 %v980, %v976
  %v1221 = vpack.c.b16 %v985, %v981
  %v1222 = vpack.c.b16 %v986, %v982
  %v1223 = vpack.c.b16 %v987, %v983
  %v1224 = vpack.c.b16 %v988, %v984
  %v1225 = vpack.c.b16 %v993, %v989
  %v1226 = vpack.c.b16 %v994, %v990
  %v1227 = vpack.c.b16 %v995, %v991
  %v1228 = vpack.c.b16 %v996, %v992
  %v1229 = vpack.c.b16 %v1001, %v997
  %v1230 = vpack.c.b16 %v1002, %v998
  %v1231 = vpack.c.b16 %v1003, %v999
  %v1232 = vpack.c.b16 %v1004, %v1000
  %v1233 = vpack.c.b16 %v1009, %v1005
  %v1234 = vpack.c.b16 %v1010, %v1006
  %v1235 = vpack.c.b16 %v1011, %v1007
  %v1236 = vpack.c.b16 %v1012, %v1008
  %v1237 = vpack.c.b16 %v1017, %v1013
  %v1238 = vpack.c.b16 %v1018, %v1014
  %v1239 = vpack.c.b16 %v1019, %v1015
  %v1240 = vpack.c.b16 %v1020, %v1016
  %v1241 = vpack.c.b16 %v1025, %v1021
  %v1242 = vpack.c.b16 %v1026, %v1022
  %v1243 = vpack.c.b16 %v1027, %v1023
  %v1244 = vpack.c.b16 %v1028, %v1024
  %v1245 = vpack.c.b16 %v1033, %v1029
  %v1246 = vpack.c.b16 %v1034, %v1030
  %v1247 = vpack.c.b16 %v1035, %v1031
  %v1248 = vpack.c.b16 %v1036, %v1032
  %v1249 = vpack.c.b16 %v1041, %v1037
  %v1250 = vpack.c.b16 %v1042, %v1038
  %v1251 = vpack.c.b16 %v1043, %v1039
  %v1252 = vpack.c.b16 %v1044, %v1040
  %v1253 = vpack.c.b16 %v1049, %v1045
  %v1254 = vpack.c.b16 %v1050, %v1046
  %v1255 = vpack.c.b16 %v1051, %v1047
  %v1256 = vpack.c.b16 %v1052, %v1048
  %v1257 = vpack.c.b16 %v1057, %v1053
  %v1258 = vpack.c.b16 %v1058, %v1054
  %v1259 = vpack.c.b16 %v1059, %v1055
  %v1260 = vpack.c.b16 %v1060, %v1056
  %v1261 = vpack.c.b16 %v1065, %v1061
  %v1262 = vpack.c.b16 %v1066, %v1062
  %v1263 = vpack.c.b16 %v1067, %v1063
  %v1264 = vpack.c.b16 %v1068, %v1064
  %vm1461 = vcmask 130048
  %v1463 = vsel %vm1461, %v452, 0
  %v1466 = vsel %vm1461, %v459, 0
  %1468 = vmatprep.subr.bf16.mxu0 %v1070
  %1469 = vmatpush1.bf16.msra.mxu0 %v1069
  %1470 = vmatprep.subr.bf16.mxu0 %v1074
  %1471 = vmatpush1.bf16.msra.mxu0 %v1073
  %1472 = vmatprep.subr.bf16.mxu0 %v1078
  %1473 = vmatpush1.bf16.msra.mxu0 %v1077
  %1474 = vmatprep.subr.bf16.mxu0 %v1082
  %1475 = vmatpush1.bf16.msra.mxu0 %v1081
  %1476 = vmatprep.subr.bf16.mxu0 %v1086
  %1477 = vmatpush1.bf16.msra.mxu0 %v1085
  %1478 = vmatprep.subr.bf16.mxu0 %v1090
  %1479 = vmatpush1.bf16.msra.mxu0 %v1089
  %1480 = vmatprep.subr.bf16.mxu0 %v1094
  %1481 = vmatpush1.bf16.msra.mxu0 %v1093
  %1482 = vmatprep.subr.bf16.mxu0 %v1098
  %1483 = vmatpush1.bf16.msra.mxu0 %v1097
  %1484 = vmatprep.subr.bf16.mxu0 %v1102
  %1485 = vmatpush1.bf16.msra.mxu0 %v1101
  %1486 = vmatprep.subr.bf16.mxu0 %v1106
  %1487 = vmatpush1.bf16.msra.mxu0 %v1105
  %1488 = vmatprep.subr.bf16.mxu0 %v1110
  %1489 = vmatpush1.bf16.msra.mxu0 %v1109
  %1490 = vmatprep.subr.bf16.mxu0 %v1114
  %1491 = vmatpush1.bf16.msra.mxu0 %v1113
  %1492 = vmatprep.subr.bf16.mxu0 %v1118
  %1493 = vmatpush1.bf16.msra.mxu0 %v1117
  %1494 = vmatprep.subr.bf16.mxu0 %v1122
  %1495 = vmatpush1.bf16.msra.mxu0 %v1121
  %1496 = vmatprep.subr.bf16.mxu0 %v1126
  %1497 = vmatpush1.bf16.msra.mxu0 %v1125
  %1498 = vmatprep.subr.bf16.mxu0 %v1130
  %1499 = vmatpush1.bf16.msra.mxu0 %v1129
  %1500 = vmatprep.mubr.bf16.mxu0 %v447
  %1501 = vmatmul.mubr.bf16.gmra.mrb[0].mxu0 %v446
  %v1502 = vpop.f32.mrb[0].mxu0
  %v1503 = vadd.f32 %v464, %v1502
  %v1504 = vpop.f32.mrb[0].mxu0
  %v1505 = vadd.f32 %v468, %v1504
  %v1506 = vpop.f32.mrb[0].mxu0
  %v1507 = vadd.f32 %v464, %v1506
  %v1508 = vpop.f32.mrb[0].mxu0
  %v1509 = vadd.f32 %v468, %v1508
  %1510 = vmatprep.mubr.bf16.mxu0 %v454
  %1511 = vmatmul.mubr.bf16.gmra.mrb[0].mxu0 %v453
  %v1512 = vpop.f32.mrb[0].mxu0
  %v1513 = vadd.f32 %v464, %v1512
  %v1514 = vpop.f32.mrb[0].mxu0
  %v1515 = vadd.f32 %v468, %v1514
  %v1516 = vpop.f32.mrb[0].mxu0
  %v1517 = vadd.f32 %v464, %v1516
  %v1518 = vpop.f32.mrb[0].mxu0
  %v1519 = vadd.f32 %v468, %v1518
  %1520 = vdwg.mxu0
  %1521 = vmatprep.subr.bf16.mxu0 %v1134
  %1522 = vmatpush1.bf16.msra.mxu0 %v1133
  %1523 = vmatprep.subr.bf16.mxu0 %v1138
  %1524 = vmatpush1.bf16.msra.mxu0 %v1137
  %1525 = vmatprep.subr.bf16.mxu0 %v1142
  %1526 = vmatpush1.bf16.msra.mxu0 %v1141
  %1527 = vmatprep.subr.bf16.mxu0 %v1146
  %1528 = vmatpush1.bf16.msra.mxu0 %v1145
  %1529 = vmatprep.subr.bf16.mxu0 %v1150
  %1530 = vmatpush1.bf16.msra.mxu0 %v1149
  %1531 = vmatprep.subr.bf16.mxu0 %v1154
  %1532 = vmatpush1.bf16.msra.mxu0 %v1153
  %1533 = vmatprep.subr.bf16.mxu0 %v1158
  %1534 = vmatpush1.bf16.msra.mxu0 %v1157
  %1535 = vmatprep.subr.bf16.mxu0 %v1162
  %1536 = vmatpush1.bf16.msra.mxu0 %v1161
  %1537 = vmatprep.subr.bf16.mxu0 %v1166
  %1538 = vmatpush1.bf16.msra.mxu0 %v1165
  %1539 = vmatprep.subr.bf16.mxu0 %v1170
  %1540 = vmatpush1.bf16.msra.mxu0 %v1169
  %1541 = vmatprep.subr.bf16.mxu0 %v1174
  %1542 = vmatpush1.bf16.msra.mxu0 %v1173
  %1543 = vmatprep.subr.bf16.mxu0 %v1178
  %1544 = vmatpush1.bf16.msra.mxu0 %v1177
  %1545 = vmatprep.subr.bf16.mxu0 %v1182
  %1546 = vmatpush1.bf16.msra.mxu0 %v1181
  %1547 = vmatprep.subr.bf16.mxu0 %v1186
  %1548 = vmatpush1.bf16.msra.mxu0 %v1185
  %1549 = vmatprep.subr.bf16.mxu0 %v1190
  %1550 = vmatpush1.bf16.msra.mxu0 %v1189
  %1551 = vmatprep.subr.bf16.mxu0 %v1194
  %1552 = vmatpush1.bf16.msra.mxu0 %v1193
  %1553 = vmatprep.mubr.bf16.mxu0 %v449
  %1554 = vmatmul.mubr.bf16.gmra.mrb[0].mxu0 %v448
  %v1555 = vpop.f32.mrb[0].mxu0
  %v1556 = vadd.f32 %v1503, %v1555
  %v1557 = vpop.f32.mrb[0].mxu0
  %v1558 = vadd.f32 %v1505, %v1557
  %v1559 = vpop.f32.mrb[0].mxu0
  %v1560 = vadd.f32 %v1507, %v1559
  %v1561 = vpop.f32.mrb[0].mxu0
  %v1562 = vadd.f32 %v1509, %v1561
  %1563 = vmatprep.mubr.bf16.mxu0 %v456
  %1564 = vmatmul.mubr.bf16.gmra.mrb[0].mxu0 %v455
  %v1565 = vpop.f32.mrb[0].mxu0
  %v1566 = vadd.f32 %v1513, %v1565
  %v1567 = vpop.f32.mrb[0].mxu0
  %v1568 = vadd.f32 %v1515, %v1567
  %v1569 = vpop.f32.mrb[0].mxu0
  %v1570 = vadd.f32 %v1517, %v1569
  %v1571 = vpop.f32.mrb[0].mxu0
  %v1572 = vadd.f32 %v1519, %v1571
  %1573 = vdwg.mxu0
  %1574 = vmatprep.subr.bf16.mxu0 %v1198
  %1575 = vmatpush1.bf16.msra.mxu0 %v1197
  %1576 = vmatprep.subr.bf16.mxu0 %v1202
  %1577 = vmatpush1.bf16.msra.mxu0 %v1201
  %1578 = vmatprep.subr.bf16.mxu0 %v1206
  %1579 = vmatpush1.bf16.msra.mxu0 %v1205
  %1580 = vmatprep.subr.bf16.mxu0 %v1210
  %1581 = vmatpush1.bf16.msra.mxu0 %v1209
  %1582 = vmatprep.subr.bf16.mxu0 %v1214
  %1583 = vmatpush1.bf16.msra.mxu0 %v1213
  %1584 = vmatprep.subr.bf16.mxu0 %v1218
  %1585 = vmatpush1.bf16.msra.mxu0 %v1217
  %1586 = vmatprep.subr.bf16.mxu0 %v1222
  %1587 = vmatpush1.bf16.msra.mxu0 %v1221
  %1588 = vmatprep.subr.bf16.mxu0 %v1226
  %1589 = vmatpush1.bf16.msra.mxu0 %v1225
  %1590 = vmatprep.subr.bf16.mxu0 %v1230
  %1591 = vmatpush1.bf16.msra.mxu0 %v1229
  %1592 = vmatprep.subr.bf16.mxu0 %v1234
  %1593 = vmatpush1.bf16.msra.mxu0 %v1233
  %1594 = vmatprep.subr.bf16.mxu0 %v1238
  %1595 = vmatpush1.bf16.msra.mxu0 %v1237
  %1596 = vmatprep.subr.bf16.mxu0 %v1242
  %1597 = vmatpush1.bf16.msra.mxu0 %v1241
  %1598 = vmatprep.subr.bf16.mxu0 %v1246
  %1599 = vmatpush1.bf16.msra.mxu0 %v1245
  %1600 = vmatprep.subr.bf16.mxu0 %v1250
  %1601 = vmatpush1.bf16.msra.mxu0 %v1249
  %1602 = vmatprep.subr.bf16.mxu0 %v1254
  %1603 = vmatpush1.bf16.msra.mxu0 %v1253
  %1604 = vmatprep.subr.bf16.mxu0 %v1258
  %1605 = vmatpush1.bf16.msra.mxu0 %v1257
  %1606 = vmatprep.mubr.bf16.mxu0 %v451
  %1607 = vmatmul.mubr.bf16.gmra.mrb[0].mxu0 %v450
  %v1608 = vpop.f32.mrb[0].mxu0
  %v1609 = vadd.f32 %v1556, %v1608
  %v1610 = vpop.f32.mrb[0].mxu0
  %v1611 = vadd.f32 %v1558, %v1610
  %v1612 = vpop.f32.mrb[0].mxu0
  %v1613 = vadd.f32 %v1560, %v1612
  %v1614 = vpop.f32.mrb[0].mxu0
  %v1615 = vadd.f32 %v1562, %v1614
  %1616 = vmatprep.mubr.bf16.mxu0 %v458
  %1617 = vmatmul.mubr.bf16.gmra.mrb[0].mxu0 %v457
  %v1618 = vpop.f32.mrb[0].mxu0
  %v1619 = vadd.f32 %v1566, %v1618
  %v1620 = vpop.f32.mrb[0].mxu0
  %v1621 = vadd.f32 %v1568, %v1620
  %v1622 = vpop.f32.mrb[0].mxu0
  %v1623 = vadd.f32 %v1570, %v1622
  %v1624 = vpop.f32.mrb[0].mxu0
  %v1625 = vadd.f32 %v1572, %v1624
  %1626 = vdwg.mxu0
  %1627 = vmatprep.subr.bf16.mxu0 %v1262
  %1628 = vmatpush1.bf16.msra.mxu0 %v1261
  %1629 = vmatprep.subr.bf16.mxu0 0
  %1630 = vmatpush1.bf16.msra.mxu0 0
  %1631 = vmatprep.subr.bf16.mxu0 0
  %1632 = vmatpush1.bf16.msra.mxu0 0
  %1633 = vmatprep.subr.bf16.mxu0 0
  %1634 = vmatpush1.bf16.msra.mxu0 0
  %1635 = vmatprep.subr.bf16.mxu0 0
  %1636 = vmatpush1.bf16.msra.mxu0 0
  %1637 = vmatprep.subr.bf16.mxu0 0
  %1638 = vmatpush1.bf16.msra.mxu0 0
  %1639 = vmatprep.subr.bf16.mxu0 0
  %1640 = vmatpush1.bf16.msra.mxu0 0
  %1641 = vmatprep.subr.bf16.mxu0 0
  %1642 = vmatpush1.bf16.msra.mxu0 0
  %1643 = vmatprep.subr.bf16.mxu0 0
  %1644 = vmatpush1.bf16.msra.mxu0 0
  %1645 = vmatprep.subr.bf16.mxu0 0
  %1646 = vmatpush1.bf16.msra.mxu0 0
  %1647 = vmatprep.subr.bf16.mxu0 0
  %1648 = vmatpush1.bf16.msra.mxu0 0
  %1649 = vmatprep.subr.bf16.mxu0 0
  %1650 = vmatpush1.bf16.msra.mxu0 0
  %1651 = vmatprep.subr.bf16.mxu0 0
  %1652 = vmatpush1.bf16.msra.mxu0 0
  %1653 = vmatprep.subr.bf16.mxu0 0
  %1654 = vmatpush1.bf16.msra.mxu0 0
  %1655 = vmatprep.subr.bf16.mxu0 0
  %1656 = vmatpush1.bf16.msra.mxu0 0
  %1657 = vmatprep.subr.bf16.mxu0 0
  %1658 = vmatpush1.bf16.msra.mxu0 0
  %1659 = vmatprep.mubr.bf16.mxu0 0
  %1660 = vmatmul.mubr.bf16.gmra.mrb[0].mxu0 %v1463
  %v1661 = vpop.f32.mrb[0].mxu0
  %v1662 = vadd.f32 %v1609, %v1661
  %v1663 = vpop.f32.mrb[0].mxu0
  %v1664 = vadd.f32 %v1611, %v1663
  %v1665 = vpop.f32.mrb[0].mxu0
  %v1666 = vadd.f32 %v1613, %v1665
  %v1667 = vpop.f32.mrb[0].mxu0
  %v1668 = vadd.f32 %v1615, %v1667
  %1669 = vmatprep.mubr.bf16.mxu0 0
  %1670 = vmatmul.mubr.bf16.gmra.mrb[0].mxu0 %v1466
  %v1671 = vpop.f32.mrb[0].mxu0
  %v1672 = vadd.f32 %v1619, %v1671
  %v1673 = vpop.f32.mrb[0].mxu0
  %v1674 = vadd.f32 %v1621, %v1673
  %v1675 = vpop.f32.mrb[0].mxu0
  %v1676 = vadd.f32 %v1623, %v1675
  %v1677 = vpop.f32.mrb[0].mxu0
  %v1678 = vadd.f32 %v1625, %v1677
  %1679 = vdwg.mxu0
  %1680 = vmatprep.subr.bf16.mxu0 %v1072
  %1681 = vmatpush1.bf16.msra.mxu0 %v1071
  %1682 = vmatprep.subr.bf16.mxu0 %v1076
  %1683 = vmatpush1.bf16.msra.mxu0 %v1075
  %1684 = vmatprep.subr.bf16.mxu0 %v1080
  %1685 = vmatpush1.bf16.msra.mxu0 %v1079
  %1686 = vmatprep.subr.bf16.mxu0 %v1084
  %1687 = vmatpush1.bf16.msra.mxu0 %v1083
  %1688 = vmatprep.subr.bf16.mxu0 %v1088
  %1689 = vmatpush1.bf16.msra.mxu0 %v1087
  %1690 = vmatprep.subr.bf16.mxu0 %v1092
  %1691 = vmatpush1.bf16.msra.mxu0 %v1091
  %1692 = vmatprep.subr.bf16.mxu0 %v1096
  %1693 = vmatpush1.bf16.msra.mxu0 %v1095
  %1694 = vmatprep.subr.bf16.mxu0 %v1100
  %1695 = vmatpush1.bf16.msra.mxu0 %v1099
  %1696 = vmatprep.subr.bf16.mxu0 %v1104
  %1697 = vmatpush1.bf16.msra.mxu0 %v1103
  %1698 = vmatprep.subr.bf16.mxu0 %v1108
  %1699 = vmatpush1.bf16.msra.mxu0 %v1107
  %1700 = vmatprep.subr.bf16.mxu0 %v1112
  %1701 = vmatpush1.bf16.msra.mxu0 %v1111
  %1702 = vmatprep.subr.bf16.mxu0 %v1116
  %1703 = vmatpush1.bf16.msra.mxu0 %v1115
  %1704 = vmatprep.subr.bf16.mxu0 %v1120
  %1705 = vmatpush1.bf16.msra.mxu0 %v1119
  %1706 = vmatprep.subr.bf16.mxu0 %v1124
  %1707 = vmatpush1.bf16.msra.mxu0 %v1123
  %1708 = vmatprep.subr.bf16.mxu0 %v1128
  %1709 = vmatpush1.bf16.msra.mxu0 %v1127
  %1710 = vmatprep.subr.bf16.mxu0 %v1132
  %1711 = vmatpush1.bf16.msra.mxu0 %v1131
  %1712 = vmatprep.mubr.bf16.mxu0 %v447
  %1713 = vmatmul.mubr.bf16.gmra.mrb[0].mxu0 %v446
  %v1714 = vpop.f32.mrb[0].mxu0
  %v1715 = vadd.f32 %v472, %v1714
  %v1716 = vpop.f32.mrb[0].mxu0
  %v1717 = vadd.f32 %v476, %v1716
  %v1718 = vpop.f32.mrb[0].mxu0
  %v1719 = vadd.f32 %v472, %v1718
  %v1720 = vpop.f32.mrb[0].mxu0
  %v1721 = vadd.f32 %v476, %v1720
  %1722 = vmatprep.mubr.bf16.mxu0 %v454
  %1723 = vmatmul.mubr.bf16.gmra.mrb[0].mxu0 %v453
  %v1724 = vpop.f32.mrb[0].mxu0
  %v1725 = vadd.f32 %v472, %v1724
  %v1726 = vpop.f32.mrb[0].mxu0
  %v1727 = vadd.f32 %v476, %v1726
  %v1728 = vpop.f32.mrb[0].mxu0
  %v1729 = vadd.f32 %v472, %v1728
  %v1730 = vpop.f32.mrb[0].mxu0
  %v1731 = vadd.f32 %v476, %v1730
  %1732 = vdwg.mxu0
  %1733 = vmatprep.subr.bf16.mxu0 %v1136
  %1734 = vmatpush1.bf16.msra.mxu0 %v1135
  %1735 = vmatprep.subr.bf16.mxu0 %v1140
  %1736 = vmatpush1.bf16.msra.mxu0 %v1139
  %1737 = vmatprep.subr.bf16.mxu0 %v1144
  %1738 = vmatpush1.bf16.msra.mxu0 %v1143
  %1739 = vmatprep.subr.bf16.mxu0 %v1148
  %1740 = vmatpush1.bf16.msra.mxu0 %v1147
  %1741 = vmatprep.subr.bf16.mxu0 %v1152
  %1742 = vmatpush1.bf16.msra.mxu0 %v1151
  %1743 = vmatprep.subr.bf16.mxu0 %v1156
  %1744 = vmatpush1.bf16.msra.mxu0 %v1155
  %1745 = vmatprep.subr.bf16.mxu0 %v1160
  %1746 = vmatpush1.bf16.msra.mxu0 %v1159
  %1747 = vmatprep.subr.bf16.mxu0 %v1164
  %1748 = vmatpush1.bf16.msra.mxu0 %v1163
  %1749 = vmatprep.subr.bf16.mxu0 %v1168
  %1750 = vmatpush1.bf16.msra.mxu0 %v1167
  %1751 = vmatprep.subr.bf16.mxu0 %v1172
  %1752 = vmatpush1.bf16.msra.mxu0 %v1171
  %1753 = vmatprep.subr.bf16.mxu0 %v1176
  %1754 = vmatpush1.bf16.msra.mxu0 %v1175
  %1755 = vmatprep.subr.bf16.mxu0 %v1180
  %1756 = vmatpush1.bf16.msra.mxu0 %v1179
  %1757 = vmatprep.subr.bf16.mxu0 %v1184
  %1758 = vmatpush1.bf16.msra.mxu0 %v1183
  %1759 = vmatprep.subr.bf16.mxu0 %v1188
  %1760 = vmatpush1.bf16.msra.mxu0 %v1187
  %1761 = vmatprep.subr.bf16.mxu0 %v1192
  %1762 = vmatpush1.bf16.msra.mxu0 %v1191
  %1763 = vmatprep.subr.bf16.mxu0 %v1196
  %1764 = vmatpush1.bf16.msra.mxu0 %v1195
  %1765 = vmatprep.mubr.bf16.mxu0 %v449
  %1766 = vmatmul.mubr.bf16.gmra.mrb[0].mxu0 %v448
  %v1767 = vpop.f32.mrb[0].mxu0
  %v1768 = vadd.f32 %v1715, %v1767
  %v1769 = vpop.f32.mrb[0].mxu0
  %v1770 = vadd.f32 %v1717, %v1769
  %v1771 = vpop.f32.mrb[0].mxu0
  %v1772 = vadd.f32 %v1719, %v1771
  %v1773 = vpop.f32.mrb[0].mxu0
  %v1774 = vadd.f32 %v1721, %v1773
  %1775 = vmatprep.mubr.bf16.mxu0 %v456
  %1776 = vmatmul.mubr.bf16.gmra.mrb[0].mxu0 %v455
  %v1777 = vpop.f32.mrb[0].mxu0
  %v1778 = vadd.f32 %v1725, %v1777
  %v1779 = vpop.f32.mrb[0].mxu0
  %v1780 = vadd.f32 %v1727, %v1779
  %v1781 = vpop.f32.mrb[0].mxu0
  %v1782 = vadd.f32 %v1729, %v1781
  %v1783 = vpop.f32.mrb[0].mxu0
  %v1784 = vadd.f32 %v1731, %v1783
  %1785 = vdwg.mxu0
  %1786 = vmatprep.subr.bf16.mxu0 %v1200
  %1787 = vmatpush1.bf16.msra.mxu0 %v1199
  %1788 = vmatprep.subr.bf16.mxu0 %v1204
  %1789 = vmatpush1.bf16.msra.mxu0 %v1203
  %1790 = vmatprep.subr.bf16.mxu0 %v1208
  %1791 = vmatpush1.bf16.msra.mxu0 %v1207
  %1792 = vmatprep.subr.bf16.mxu0 %v1212
  %1793 = vmatpush1.bf16.msra.mxu0 %v1211
  %1794 = vmatprep.subr.bf16.mxu0 %v1216
  %1795 = vmatpush1.bf16.msra.mxu0 %v1215
  %1796 = vmatprep.subr.bf16.mxu0 %v1220
  %1797 = vmatpush1.bf16.msra.mxu0 %v1219
  %1798 = vmatprep.subr.bf16.mxu0 %v1224
  %1799 = vmatpush1.bf16.msra.mxu0 %v1223
  %1800 = vmatprep.subr.bf16.mxu0 %v1228
  %1801 = vmatpush1.bf16.msra.mxu0 %v1227
  %1802 = vmatprep.subr.bf16.mxu0 %v1232
  %1803 = vmatpush1.bf16.msra.mxu0 %v1231
  %1804 = vmatprep.subr.bf16.mxu0 %v1236
  %1805 = vmatpush1.bf16.msra.mxu0 %v1235
  %1806 = vmatprep.subr.bf16.mxu0 %v1240
  %1807 = vmatpush1.bf16.msra.mxu0 %v1239
  %1808 = vmatprep.subr.bf16.mxu0 %v1244
  %1809 = vmatpush1.bf16.msra.mxu0 %v1243
  %1810 = vmatprep.subr.bf16.mxu0 %v1248
  %1811 = vmatpush1.bf16.msra.mxu0 %v1247
  %1812 = vmatprep.subr.bf16.mxu0 %v1252
  %1813 = vmatpush1.bf16.msra.mxu0 %v1251
  %1814 = vmatprep.subr.bf16.mxu0 %v1256
  %1815 = vmatpush1.bf16.msra.mxu0 %v1255
  %1816 = vmatprep.subr.bf16.mxu0 %v1260
  %1817 = vmatpush1.bf16.msra.mxu0 %v1259
  %1818 = vmatprep.mubr.bf16.mxu0 %v451
  %1819 = vmatmul.mubr.bf16.gmra.mrb[0].mxu0 %v450
  %v1820 = vpop.f32.mrb[0].mxu0
  %v1821 = vadd.f32 %v1768, %v1820
  %v1822 = vpop.f32.mrb[0].mxu0
  %v1823 = vadd.f32 %v1770, %v1822
  %v1824 = vpop.f32.mrb[0].mxu0
  %v1825 = vadd.f32 %v1772, %v1824
  %v1826 = vpop.f32.mrb[0].mxu0
  %v1827 = vadd.f32 %v1774, %v1826
  %1828 = vmatprep.mubr.bf16.mxu0 %v458
  %1829 = vmatmul.mubr.bf16.gmra.mrb[0].mxu0 %v457
  %v1830 = vpop.f32.mrb[0].mxu0
  %v1831 = vadd.f32 %v1778, %v1830
  %v1832 = vpop.f32.mrb[0].mxu0
  %v1833 = vadd.f32 %v1780, %v1832
  %v1834 = vpop.f32.mrb[0].mxu0
  %v1835 = vadd.f32 %v1782, %v1834
  %v1836 = vpop.f32.mrb[0].mxu0
  %v1837 = vadd.f32 %v1784, %v1836
  %1838 = vdwg.mxu0
  %1839 = vmatprep.subr.bf16.mxu0 %v1264
  %1840 = vmatpush1.bf16.msra.mxu0 %v1263
  %1841 = vmatprep.subr.bf16.mxu0 0
  %1842 = vmatpush1.bf16.msra.mxu0 0
  %1843 = vmatprep.subr.bf16.mxu0 0
  %1844 = vmatpush1.bf16.msra.mxu0 0
  %1845 = vmatprep.subr.bf16.mxu0 0
  %1846 = vmatpush1.bf16.msra.mxu0 0
  %1847 = vmatprep.subr.bf16.mxu0 0
  %1848 = vmatpush1.bf16.msra.mxu0 0
  %1849 = vmatprep.subr.bf16.mxu0 0
  %1850 = vmatpush1.bf16.msra.mxu0 0
  %1851 = vmatprep.subr.bf16.mxu0 0
  %1852 = vmatpush1.bf16.msra.mxu0 0
  %1853 = vmatprep.subr.bf16.mxu0 0
  %1854 = vmatpush1.bf16.msra.mxu0 0
  %1855 = vmatprep.subr.bf16.mxu0 0
  %1856 = vmatpush1.bf16.msra.mxu0 0
  %1857 = vmatprep.subr.bf16.mxu0 0
  %1858 = vmatpush1.bf16.msra.mxu0 0
  %1859 = vmatprep.subr.bf16.mxu0 0
  %1860 = vmatpush1.bf16.msra.mxu0 0
  %1861 = vmatprep.subr.bf16.mxu0 0
  %1862 = vmatpush1.bf16.msra.mxu0 0
  %1863 = vmatprep.subr.bf16.mxu0 0
  %1864 = vmatpush1.bf16.msra.mxu0 0
  %1865 = vmatprep.subr.bf16.mxu0 0
  %1866 = vmatpush1.bf16.msra.mxu0 0
  %1867 = vmatprep.subr.bf16.mxu0 0
  %1868 = vmatpush1.bf16.msra.mxu0 0
  %1869 = vmatprep.subr.bf16.mxu0 0
  %1870 = vmatpush1.bf16.msra.mxu0 0
  %1871 = vmatprep.mubr.bf16.mxu0 0
  %1872 = vmatmul.mubr.bf16.gmra.mrb[0].mxu0 %v1463
  %v1873 = vpop.f32.mrb[0].mxu0
  %v1874 = vadd.f32 %v1821, %v1873
  %v1875 = vpop.f32.mrb[0].mxu0
  %v1876 = vadd.f32 %v1823, %v1875
  %v1877 = vpop.f32.mrb[0].mxu0
  %v1878 = vadd.f32 %v1825, %v1877
  %v1879 = vpop.f32.mrb[0].mxu0
  %v1880 = vadd.f32 %v1827, %v1879
  %1881 = vmatprep.mubr.bf16.mxu0 0
  %1882 = vmatmul.mubr.bf16.gmra.mrb[0].mxu0 %v1466
  %v1883 = vpop.f32.mrb[0].mxu0
  %v1884 = vadd.f32 %v1831, %v1883
  %v1885 = vpop.f32.mrb[0].mxu0
  %v1886 = vadd.f32 %v1833, %v1885
  %v1887 = vpop.f32.mrb[0].mxu0
  %v1888 = vadd.f32 %v1835, %v1887
  %v1889 = vpop.f32.mrb[0].mxu0
  %v1890 = vadd.f32 %v1837, %v1889
  %1891 = vdwg.mxu0
  %v1892 = vmax.f32 %v1662, 0.0
  %v1893 = vmax.f32 %v1664, 0.0
  %v1894 = vmax.f32 %v1874, 0.0
  %v1895 = vmax.f32 %v1876, 0.0
  %v1896 = vmax.f32 %v1666, 0.0
  %v1897 = vmax.f32 %v1668, 0.0
  %v1898 = vmax.f32 %v1878, 0.0
  %v1899 = vmax.f32 %v1880, 0.0
  %v1900 = vmax.f32 %v1672, 0.0
  %v1901 = vmax.f32 %v1674, 0.0
  %v1902 = vmax.f32 %v1884, 0.0
  %v1903 = vmax.f32 %v1886, 0.0
  %v1904 = vmax.f32 %v1676, 0.0
  %v1905 = vmax.f32 %v1678, 0.0
  %v1906 = vmax.f32 %v1888, 0.0
  %v1907 = vmax.f32 %v1890, 0.0
  %v1908 = vpack.c.bf16 %v1896, %v1892
  %v1909 = vpack.c.bf16 %v1897, %v1893
  %v1910 = vpack.c.bf16 %v1898, %v1894
  %v1911 = vpack.c.bf16 %v1899, %v1895
  %v1912 = vpack.c.bf16 %v1904, %v1900
  %v1913 = vpack.c.bf16 %v1905, %v1901
  %v1914 = vpack.c.bf16 %v1906, %v1902
  %v1915 = vpack.c.bf16 %v1907, %v1903
  %v1917 = vlaneseq
  %v1918 = vshrl.u32 %v1917, 7
  %v1919 = vsub.s32 0, %v1918
  %v1920 = vrot.slane %v416, %v1919
  %v1921 = vlaneseq
  %v1922 = vshrl.u32 %v1921, 7
  %v1923 = vsub.s32 1, %v1922
  %v1924 = vrot.slane %v416, %v1923
  %v1925 = vlaneseq
  %v1926 = vshrl.u32 %v1925, 7
  %v1927 = vsub.s32 2, %v1926
  %v1928 = vrot.slane %v416, %v1927
  %v1929 = vlaneseq
  %v1930 = vshrl.u32 %v1929, 7
  %v1931 = vsub.s32 3, %v1930
  %v1932 = vrot.slane %v416, %v1931
  %v2065 = vunpack.c.l.b16 %v223
  %v2066 = vunpack.c.h.b16 %v223
  %v2067 = vunpack.c.l.b16 %v224
  %v2068 = vunpack.c.h.b16 %v224
  %v2069 = vunpack.c.l.b16 %v225
  %v2070 = vunpack.c.h.b16 %v225
  %v2071 = vunpack.c.l.b16 %v226
  %v2072 = vunpack.c.h.b16 %v226
  %v2073 = vunpack.c.l.b16 %v227
  %v2074 = vunpack.c.h.b16 %v227
  %v2075 = vunpack.c.l.b16 %v228
  %v2076 = vunpack.c.h.b16 %v228
  %v2077 = vunpack.c.l.b16 %v229
  %v2078 = vunpack.c.h.b16 %v229
  %v2079 = vunpack.c.l.b16 %v230
  %v2080 = vunpack.c.h.b16 %v230
  %v2081 = vunpack.c.l.b16 %v231
  %v2082 = vunpack.c.h.b16 %v231
  %v2083 = vunpack.c.l.b16 %v232
  %v2084 = vunpack.c.h.b16 %v232
  %v2085 = vunpack.c.l.b16 %v233
  %v2086 = vunpack.c.h.b16 %v233
  %v2087 = vunpack.c.l.b16 %v234
  %v2088 = vunpack.c.h.b16 %v234
  %v2089 = vunpack.c.l.b16 %v235
  %v2090 = vunpack.c.h.b16 %v235
  %v2091 = vunpack.c.l.b16 %v236
  %v2092 = vunpack.c.h.b16 %v236
  %v2093 = vunpack.c.l.b16 %v237
  %v2094 = vunpack.c.h.b16 %v237
  %v2095 = vunpack.c.l.b16 %v238
  %v2096 = vunpack.c.h.b16 %v238
  %v2097 = vunpack.c.l.b16 %v239
  %v2098 = vunpack.c.h.b16 %v239
  %v2099 = vunpack.c.l.b16 %v240
  %v2100 = vunpack.c.h.b16 %v240
  %v2101 = vunpack.c.l.b16 %v241
  %v2102 = vunpack.c.h.b16 %v241
  %v2103 = vunpack.c.l.b16 %v242
  %v2104 = vunpack.c.h.b16 %v242
  %v2105 = vunpack.c.l.b16 %v243
  %v2106 = vunpack.c.h.b16 %v243
  %v2107 = vunpack.c.l.b16 %v244
  %v2108 = vunpack.c.h.b16 %v244
  %v2109 = vunpack.c.l.b16 %v245
  %v2110 = vunpack.c.h.b16 %v245
  %v2111 = vunpack.c.l.b16 %v246
  %v2112 = vunpack.c.h.b16 %v246
  %v2113 = vunpack.c.l.b16 %v247
  %v2114 = vunpack.c.h.b16 %v247
  %v2115 = vunpack.c.l.b16 %v248
  %v2116 = vunpack.c.h.b16 %v248
  %v2117 = vunpack.c.l.b16 %v249
  %v2118 = vunpack.c.h.b16 %v249
  %v2119 = vunpack.c.l.b16 %v250
  %v2120 = vunpack.c.h.b16 %v250
  %v2121 = vunpack.c.l.b16 %v251
  %v2122 = vunpack.c.h.b16 %v251
  %v2123 = vunpack.c.l.b16 %v252
  %v2124 = vunpack.c.h.b16 %v252
  %v2125 = vunpack.c.l.b16 %v253
  %v2126 = vunpack.c.h.b16 %v253
  %v2127 = vunpack.c.l.b16 %v254
  %v2128 = vunpack.c.h.b16 %v254
  %v2129 = vunpack.c.l.b16 %v255
  %v2130 = vunpack.c.h.b16 %v255
  %v2131 = vunpack.c.l.b16 %v256
  %v2132 = vunpack.c.h.b16 %v256
  %v2133 = vunpack.c.l.b16 %v257
  %v2134 = vunpack.c.h.b16 %v257
  %v2135 = vunpack.c.l.b16 %v258
  %v2136 = vunpack.c.h.b16 %v258
  %v2137 = vunpack.c.l.b16 %v259
  %v2138 = vunpack.c.h.b16 %v259
  %v2139 = vunpack.c.l.b16 %v260
  %v2140 = vunpack.c.h.b16 %v260
  %v2141 = vunpack.c.l.b16 %v261
  %v2142 = vunpack.c.h.b16 %v261
  %v2143 = vunpack.c.l.b16 %v262
  %v2144 = vunpack.c.h.b16 %v262
  %v2145 = vunpack.c.l.b16 %v263
  %v2146 = vunpack.c.h.b16 %v263
  %v2147 = vunpack.c.l.b16 %v264
  %v2148 = vunpack.c.h.b16 %v264
  %v2149 = vunpack.c.l.b16 %v265
  %v2150 = vunpack.c.h.b16 %v265
  %v2151 = vunpack.c.l.b16 %v266
  %v2152 = vunpack.c.h.b16 %v266
  %v2153 = vunpack.c.l.b16 %v267
  %v2154 = vunpack.c.h.b16 %v267
  %v2155 = vunpack.c.l.b16 %v268
  %v2156 = vunpack.c.h.b16 %v268
  %v2157 = vunpack.c.l.b16 %v269
  %v2158 = vunpack.c.h.b16 %v269
  %v2159 = vunpack.c.l.b16 %v270
  %v2160 = vunpack.c.h.b16 %v270
  %v2161 = vunpack.c.l.b16 %v271
  %v2162 = vunpack.c.h.b16 %v271
  %v2163 = vunpack.c.l.b16 %v272
  %v2164 = vunpack.c.h.b16 %v272
  %v2165 = vunpack.c.l.b16 %v273
  %v2166 = vunpack.c.h.b16 %v273
  %v2167 = vunpack.c.l.b16 %v274
  %v2168 = vunpack.c.h.b16 %v274
  %v2169 = vunpack.c.l.b16 %v275
  %v2170 = vunpack.c.h.b16 %v275
  %v2171 = vunpack.c.l.b16 %v276
  %v2172 = vunpack.c.h.b16 %v276
  %v2173 = vunpack.c.l.b16 %v277
  %v2174 = vunpack.c.h.b16 %v277
  %v2175 = vunpack.c.l.b16 %v278
  %v2176 = vunpack.c.h.b16 %v278
  %v2177 = vunpack.c.l.b16 %v279
  %v2178 = vunpack.c.h.b16 %v279
  %v2179 = vunpack.c.l.b16 %v280
  %v2180 = vunpack.c.h.b16 %v280
  %v2181 = vunpack.c.l.b16 %v281
  %v2182 = vunpack.c.h.b16 %v281
  %v2183 = vunpack.c.l.b16 %v282
  %v2184 = vunpack.c.h.b16 %v282
  %v2185 = vunpack.c.l.b16 %v283
  %v2186 = vunpack.c.h.b16 %v283
  %v2187 = vunpack.c.l.b16 %v284
  %v2188 = vunpack.c.h.b16 %v284
  %v2189 = vunpack.c.l.b16 %v285
  %v2190 = vunpack.c.h.b16 %v285
  %v2191 = vunpack.c.l.b16 %v286
  %v2192 = vunpack.c.h.b16 %v286
  %v2193 = vunpack.c.l.b16 %v287
  %v2194 = vunpack.c.h.b16 %v287
  %v2195 = vunpack.c.l.b16 %v288
  %v2196 = vunpack.c.h.b16 %v288
  %v2197 = vunpack.c.l.b16 %v289
  %v2198 = vunpack.c.h.b16 %v289
  %v2199 = vunpack.c.l.b16 %v290
  %v2200 = vunpack.c.h.b16 %v290
  %v2201 = vunpack.c.l.b16 %v291
  %v2202 = vunpack.c.h.b16 %v291
  %v2203 = vunpack.c.l.b16 %v292
  %v2204 = vunpack.c.h.b16 %v292
  %v2205 = vunpack.c.l.b16 %v293
  %v2206 = vunpack.c.h.b16 %v293
  %v2207 = vunpack.c.l.b16 %v294
  %v2208 = vunpack.c.h.b16 %v294
  %v2209 = vunpack.c.l.b16 %v295
  %v2210 = vunpack.c.h.b16 %v295
  %v2211 = vunpack.c.l.b16 %v296
  %v2212 = vunpack.c.h.b16 %v296
  %v2213 = vunpack.c.l.b16 %v297
  %v2214 = vunpack.c.h.b16 %v297
  %v2215 = vunpack.c.l.b16 %v298
  %v2216 = vunpack.c.h.b16 %v298
  %v2217 = vunpack.c.l.b16 %v299
  %v2218 = vunpack.c.h.b16 %v299
  %v2219 = vunpack.c.l.b16 %v300
  %v2220 = vunpack.c.h.b16 %v300
  %v2221 = vunpack.c.l.b16 %v301
  %v2222 = vunpack.c.h.b16 %v301
  %v2223 = vunpack.c.l.b16 %v302
  %v2224 = vunpack.c.h.b16 %v302
  %v2225 = vunpack.c.l.b16 %v303
  %v2226 = vunpack.c.h.b16 %v303
  %v2227 = vunpack.c.l.b16 %v304
  %v2228 = vunpack.c.h.b16 %v304
  %v2229 = vunpack.c.l.b16 %v305
  %v2230 = vunpack.c.h.b16 %v305
  %v2231 = vunpack.c.l.b16 %v306
  %v2232 = vunpack.c.h.b16 %v306
  %v2233 = vunpack.c.l.b16 %v307
  %v2234 = vunpack.c.h.b16 %v307
  %v2235 = vunpack.c.l.b16 %v308
  %v2236 = vunpack.c.h.b16 %v308
  %v2237 = vunpack.c.l.b16 %v309
  %v2238 = vunpack.c.h.b16 %v309
  %v2239 = vunpack.c.l.b16 %v310
  %v2240 = vunpack.c.h.b16 %v310
  %v2241 = vunpack.c.l.b16 %v311
  %v2242 = vunpack.c.h.b16 %v311
  %v2243 = vunpack.c.l.b16 %v312
  %v2244 = vunpack.c.h.b16 %v312
  %v2245 = vunpack.c.l.b16 %v313
  %v2246 = vunpack.c.h.b16 %v313
  %v2247 = vunpack.c.l.b16 %v314
  %v2248 = vunpack.c.h.b16 %v314
  %v2249 = vunpack.c.l.b16 %v315
  %v2250 = vunpack.c.h.b16 %v315
  %v2251 = vunpack.c.l.b16 %v316
  %v2252 = vunpack.c.h.b16 %v316
  %v2253 = vunpack.c.l.b16 %v317
  %v2254 = vunpack.c.h.b16 %v317
  %v2255 = vunpack.c.l.b16 %v318
  %v2256 = vunpack.c.h.b16 %v318
  %v2257 = vunpack.c.l.b16 %v319
  %v2258 = vunpack.c.h.b16 %v319
  %v2259 = vunpack.c.l.b16 %v320
  %v2260 = vunpack.c.h.b16 %v320
  %v2261 = vunpack.c.l.b16 %v321
  %v2262 = vunpack.c.h.b16 %v321
  %v2263 = vunpack.c.l.b16 %v322
  %v2264 = vunpack.c.h.b16 %v322
  %v2265 = vunpack.c.l.b16 %v323
  %v2266 = vunpack.c.h.b16 %v323
  %v2267 = vunpack.c.l.b16 %v324
  %v2268 = vunpack.c.h.b16 %v324
  %v2269 = vunpack.c.l.b16 %v325
  %v2270 = vunpack.c.h.b16 %v325
  %v2271 = vunpack.c.l.b16 %v326
  %v2272 = vunpack.c.h.b16 %v326
  %v2273 = vunpack.c.l.b16 %v327
  %v2274 = vunpack.c.h.b16 %v327
  %v2275 = vunpack.c.l.b16 %v328
  %v2276 = vunpack.c.h.b16 %v328
  %v2277 = vunpack.c.l.b16 %v329
  %v2278 = vunpack.c.h.b16 %v329
  %v2279 = vunpack.c.l.b16 %v330
  %v2280 = vunpack.c.h.b16 %v330
  %v2281 = vunpack.c.l.b16 %v331
  %v2282 = vunpack.c.h.b16 %v331
  %v2283 = vunpack.c.l.b16 %v332
  %v2284 = vunpack.c.h.b16 %v332
  %v2285 = vunpack.c.l.b16 %v333
  %v2286 = vunpack.c.h.b16 %v333
  %v2287 = vunpack.c.l.b16 %v334
  %v2288 = vunpack.c.h.b16 %v334
  %v2289 = vunpack.c.l.b16 %v335
  %v2290 = vunpack.c.h.b16 %v335
  %v2291 = vunpack.c.l.b16 %v336
  %v2292 = vunpack.c.h.b16 %v336
  %v2293 = vunpack.c.l.b16 %v337
  %v2294 = vunpack.c.h.b16 %v337
  %v2295 = vunpack.c.l.b16 %v338
  %v2296 = vunpack.c.h.b16 %v338
  %v2297 = vunpack.c.l.b16 %v339
  %v2298 = vunpack.c.h.b16 %v339
  %v2299 = vunpack.c.l.b16 %v340
  %v2300 = vunpack.c.h.b16 %v340
  %v2301 = vunpack.c.l.b16 %v341
  %v2302 = vunpack.c.h.b16 %v341
  %v2303 = vunpack.c.l.b16 %v342
  %v2304 = vunpack.c.h.b16 %v342
  %v2305 = vunpack.c.l.b16 %v343
  %v2306 = vunpack.c.h.b16 %v343
  %v2307 = vunpack.c.l.b16 %v344
  %v2308 = vunpack.c.h.b16 %v344
  %v2309 = vunpack.c.l.b16 %v345
  %v2310 = vunpack.c.h.b16 %v345
  %v2311 = vunpack.c.l.b16 %v346
  %v2312 = vunpack.c.h.b16 %v346
  %v2313 = vunpack.c.l.b16 %v347
  %v2314 = vunpack.c.h.b16 %v347
  %v2315 = vunpack.c.l.b16 %v348
  %v2316 = vunpack.c.h.b16 %v348
  %v2317 = vunpack.c.l.b16 %v349
  %v2318 = vunpack.c.h.b16 %v349
  %v2319 = vunpack.c.l.b16 %v350
  %v2320 = vunpack.c.h.b16 %v350
  %v2321 = vpack.c.b16 %v2069, %v2065
  %v2322 = vpack.c.b16 %v2070, %v2066
  %v2323 = vpack.c.b16 %v2071, %v2067
  %v2324 = vpack.c.b16 %v2072, %v2068
  %v2325 = vpack.c.b16 %v2077, %v2073
  %v2326 = vpack.c.b16 %v2078, %v2074
  %v2327 = vpack.c.b16 %v2079, %v2075
  %v2328 = vpack.c.b16 %v2080, %v2076
  %v2329 = vpack.c.b16 %v2085, %v2081
  %v2330 = vpack.c.b16 %v2086, %v2082
  %v2331 = vpack.c.b16 %v2087, %v2083
  %v2332 = vpack.c.b16 %v2088, %v2084
  %v2333 = vpack.c.b16 %v2093, %v2089
  %v2334 = vpack.c.b16 %v2094, %v2090
  %v2335 = vpack.c.b16 %v2095, %v2091
  %v2336 = vpack.c.b16 %v2096, %v2092
  %v2337 = vpack.c.b16 %v2101, %v2097
  %v2338 = vpack.c.b16 %v2102, %v2098
  %v2339 = vpack.c.b16 %v2103, %v2099
  %v2340 = vpack.c.b16 %v2104, %v2100
  %v2341 = vpack.c.b16 %v2109, %v2105
  %v2342 = vpack.c.b16 %v2110, %v2106
  %v2343 = vpack.c.b16 %v2111, %v2107
  %v2344 = vpack.c.b16 %v2112, %v2108
  %v2345 = vpack.c.b16 %v2117, %v2113
  %v2346 = vpack.c.b16 %v2118, %v2114
  %v2347 = vpack.c.b16 %v2119, %v2115
  %v2348 = vpack.c.b16 %v2120, %v2116
  %v2349 = vpack.c.b16 %v2125, %v2121
  %v2350 = vpack.c.b16 %v2126, %v2122
  %v2351 = vpack.c.b16 %v2127, %v2123
  %v2352 = vpack.c.b16 %v2128, %v2124
  %v2353 = vpack.c.b16 %v2133, %v2129
  %v2354 = vpack.c.b16 %v2134, %v2130
  %v2355 = vpack.c.b16 %v2135, %v2131
  %v2356 = vpack.c.b16 %v2136, %v2132
  %v2357 = vpack.c.b16 %v2141, %v2137
  %v2358 = vpack.c.b16 %v2142, %v2138
  %v2359 = vpack.c.b16 %v2143, %v2139
  %v2360 = vpack.c.b16 %v2144, %v2140
  %v2361 = vpack.c.b16 %v2149, %v2145
  %v2362 = vpack.c.b16 %v2150, %v2146
  %v2363 = vpack.c.b16 %v2151, %v2147
  %v2364 = vpack.c.b16 %v2152, %v2148
  %v2365 = vpack.c.b16 %v2157, %v2153
  %v2366 = vpack.c.b16 %v2158, %v2154
  %v2367 = vpack.c.b16 %v2159, %v2155
  %v2368 = vpack.c.b16 %v2160, %v2156
  %v2369 = vpack.c.b16 %v2165, %v2161
  %v2370 = vpack.c.b16 %v2166, %v2162
  %v2371 = vpack.c.b16 %v2167, %v2163
  %v2372 = vpack.c.b16 %v2168, %v2164
  %v2373 = vpack.c.b16 %v2173, %v2169
  %v2374 = vpack.c.b16 %v2174, %v2170
  %v2375 = vpack.c.b16 %v2175, %v2171
  %v2376 = vpack.c.b16 %v2176, %v2172
  %v2377 = vpack.c.b16 %v2181, %v2177
  %v2378 = vpack.c.b16 %v2182, %v2178
  %v2379 = vpack.c.b16 %v2183, %v2179
  %v2380 = vpack.c.b16 %v2184, %v2180
  %v2381 = vpack.c.b16 %v2189, %v2185
  %v2382 = vpack.c.b16 %v2190, %v2186
  %v2383 = vpack.c.b16 %v2191, %v2187
  %v2384 = vpack.c.b16 %v2192, %v2188
  %v2385 = vpack.c.b16 %v2197, %v2193
  %v2386 = vpack.c.b16 %v2198, %v2194
  %v2387 = vpack.c.b16 %v2199, %v2195
  %v2388 = vpack.c.b16 %v2200, %v2196
  %v2389 = vpack.c.b16 %v2205, %v2201
  %v2390 = vpack.c.b16 %v2206, %v2202
  %v2391 = vpack.c.b16 %v2207, %v2203
  %v2392 = vpack.c.b16 %v2208, %v2204
  %v2393 = vpack.c.b16 %v2213, %v2209
  %v2394 = vpack.c.b16 %v2214, %v2210
  %v2395 = vpack.c.b16 %v2215, %v2211
  %v2396 = vpack.c.b16 %v2216, %v2212
  %v2397 = vpack.c.b16 %v2221, %v2217
  %v2398 = vpack.c.b16 %v2222, %v2218
  %v2399 = vpack.c.b16 %v2223, %v2219
  %v2400 = vpack.c.b16 %v2224, %v2220
  %v2401 = vpack.c.b16 %v2229, %v2225
  %v2402 = vpack.c.b16 %v2230, %v2226
  %v2403 = vpack.c.b16 %v2231, %v2227
  %v2404 = vpack.c.b16 %v2232, %v2228
  %v2405 = vpack.c.b16 %v2237, %v2233
  %v2406 = vpack.c.b16 %v2238, %v2234
  %v2407 = vpack.c.b16 %v2239, %v2235
  %v2408 = vpack.c.b16 %v2240, %v2236
  %v2409 = vpack.c.b16 %v2245, %v2241
  %v2410 = vpack.c.b16 %v2246, %v2242
  %v2411 = vpack.c.b16 %v2247, %v2243
  %v2412 = vpack.c.b16 %v2248, %v2244
  %v2413 = vpack.c.b16 %v2253, %v2249
  %v2414 = vpack.c.b16 %v2254, %v2250
  %v2415 = vpack.c.b16 %v2255, %v2251
  %v2416 = vpack.c.b16 %v2256, %v2252
  %v2417 = vpack.c.b16 %v2261, %v2257
  %v2418 = vpack.c.b16 %v2262, %v2258
  %v2419 = vpack.c.b16 %v2263, %v2259
  %v2420 = vpack.c.b16 %v2264, %v2260
  %v2421 = vpack.c.b16 %v2269, %v2265
  %v2422 = vpack.c.b16 %v2270, %v2266
  %v2423 = vpack.c.b16 %v2271, %v2267
  %v2424 = vpack.c.b16 %v2272, %v2268
  %v2425 = vpack.c.b16 %v2277, %v2273
  %v2426 = vpack.c.b16 %v2278, %v2274
  %v2427 = vpack.c.b16 %v2279, %v2275
  %v2428 = vpack.c.b16 %v2280, %v2276
  %v2429 = vpack.c.b16 %v2285, %v2281
  %v2430 = vpack.c.b16 %v2286, %v2282
  %v2431 = vpack.c.b16 %v2287, %v2283
  %v2432 = vpack.c.b16 %v2288, %v2284
  %v2433 = vpack.c.b16 %v2293, %v2289
  %v2434 = vpack.c.b16 %v2294, %v2290
  %v2435 = vpack.c.b16 %v2295, %v2291
  %v2436 = vpack.c.b16 %v2296, %v2292
  %v2437 = vpack.c.b16 %v2301, %v2297
  %v2438 = vpack.c.b16 %v2302, %v2298
  %v2439 = vpack.c.b16 %v2303, %v2299
  %v2440 = vpack.c.b16 %v2304, %v2300
  %v2441 = vpack.c.b16 %v2309, %v2305
  %v2442 = vpack.c.b16 %v2310, %v2306
  %v2443 = vpack.c.b16 %v2311, %v2307
  %v2444 = vpack.c.b16 %v2312, %v2308
  %v2445 = vpack.c.b16 %v2317, %v2313
  %v2446 = vpack.c.b16 %v2318, %v2314
  %v2447 = vpack.c.b16 %v2319, %v2315
  %v2448 = vpack.c.b16 %v2320, %v2316
  %2577 = vmatprep.subr.bf16.mxu0 %v2322
  %2578 = vmatpush1.bf16.msra.mxu0 %v2321
  %2579 = vmatprep.subr.bf16.mxu0 %v2326
  %2580 = vmatpush1.bf16.msra.mxu0 %v2325
  %2581 = vmatprep.subr.bf16.mxu0 %v2330
  %2582 = vmatpush1.bf16.msra.mxu0 %v2329
  %2583 = vmatprep.subr.bf16.mxu0 %v2334
  %2584 = vmatpush1.bf16.msra.mxu0 %v2333
  %2585 = vmatprep.subr.bf16.mxu0 %v2338
  %2586 = vmatpush1.bf16.msra.mxu0 %v2337
  %2587 = vmatprep.subr.bf16.mxu0 %v2342
  %2588 = vmatpush1.bf16.msra.mxu0 %v2341
  %2589 = vmatprep.subr.bf16.mxu0 %v2346
  %2590 = vmatpush1.bf16.msra.mxu0 %v2345
  %2591 = vmatprep.subr.bf16.mxu0 %v2350
  %2592 = vmatpush1.bf16.msra.mxu0 %v2349
  %2593 = vmatprep.subr.bf16.mxu0 %v2354
  %2594 = vmatpush1.bf16.msra.mxu0 %v2353
  %2595 = vmatprep.subr.bf16.mxu0 %v2358
  %2596 = vmatpush1.bf16.msra.mxu0 %v2357
  %2597 = vmatprep.subr.bf16.mxu0 %v2362
  %2598 = vmatpush1.bf16.msra.mxu0 %v2361
  %2599 = vmatprep.subr.bf16.mxu0 %v2366
  %2600 = vmatpush1.bf16.msra.mxu0 %v2365
  %2601 = vmatprep.subr.bf16.mxu0 %v2370
  %2602 = vmatpush1.bf16.msra.mxu0 %v2369
  %2603 = vmatprep.subr.bf16.mxu0 %v2374
  %2604 = vmatpush1.bf16.msra.mxu0 %v2373
  %2605 = vmatprep.subr.bf16.mxu0 %v2378
  %2606 = vmatpush1.bf16.msra.mxu0 %v2377
  %2607 = vmatprep.subr.bf16.mxu0 %v2382
  %2608 = vmatpush1.bf16.msra.mxu0 %v2381
  %2609 = vmatprep.mubr.bf16.mxu0 %v1909
  %2610 = vmatmul.mubr.bf16.gmra.mrb[0].mxu0 %v1908
  %v2611 = vpop.f32.mrb[0].mxu0
  %v2612 = vadd.f32 %v1920, %v2611
  %v2613 = vpop.f32.mrb[0].mxu0
  %v2614 = vadd.f32 %v1924, %v2613
  %v2615 = vpop.f32.mrb[0].mxu0
  %v2616 = vadd.f32 %v1920, %v2615
  %v2617 = vpop.f32.mrb[0].mxu0
  %v2618 = vadd.f32 %v1924, %v2617
  %2619 = vmatprep.mubr.bf16.mxu0 %v1913
  %2620 = vmatmul.mubr.bf16.gmra.mrb[0].mxu0 %v1912
  %v2621 = vpop.f32.mrb[0].mxu0
  %v2622 = vadd.f32 %v1920, %v2621
  %v2623 = vpop.f32.mrb[0].mxu0
  %v2624 = vadd.f32 %v1924, %v2623
  %v2625 = vpop.f32.mrb[0].mxu0
  %v2626 = vadd.f32 %v1920, %v2625
  %v2627 = vpop.f32.mrb[0].mxu0
  %v2628 = vadd.f32 %v1924, %v2627
  %2629 = vdwg.mxu0
  %2630 = vmatprep.subr.bf16.mxu0 %v2386
  %2631 = vmatpush1.bf16.msra.mxu0 %v2385
  %2632 = vmatprep.subr.bf16.mxu0 %v2390
  %2633 = vmatpush1.bf16.msra.mxu0 %v2389
  %2634 = vmatprep.subr.bf16.mxu0 %v2394
  %2635 = vmatpush1.bf16.msra.mxu0 %v2393
  %2636 = vmatprep.subr.bf16.mxu0 %v2398
  %2637 = vmatpush1.bf16.msra.mxu0 %v2397
  %2638 = vmatprep.subr.bf16.mxu0 %v2402
  %2639 = vmatpush1.bf16.msra.mxu0 %v2401
  %2640 = vmatprep.subr.bf16.mxu0 %v2406
  %2641 = vmatpush1.bf16.msra.mxu0 %v2405
  %2642 = vmatprep.subr.bf16.mxu0 %v2410
  %2643 = vmatpush1.bf16.msra.mxu0 %v2409
  %2644 = vmatprep.subr.bf16.mxu0 %v2414
  %2645 = vmatpush1.bf16.msra.mxu0 %v2413
  %2646 = vmatprep.subr.bf16.mxu0 %v2418
  %2647 = vmatpush1.bf16.msra.mxu0 %v2417
  %2648 = vmatprep.subr.bf16.mxu0 %v2422
  %2649 = vmatpush1.bf16.msra.mxu0 %v2421
  %2650 = vmatprep.subr.bf16.mxu0 %v2426
  %2651 = vmatpush1.bf16.msra.mxu0 %v2425
  %2652 = vmatprep.subr.bf16.mxu0 %v2430
  %2653 = vmatpush1.bf16.msra.mxu0 %v2429
  %2654 = vmatprep.subr.bf16.mxu0 %v2434
  %2655 = vmatpush1.bf16.msra.mxu0 %v2433
  %2656 = vmatprep.subr.bf16.mxu0 %v2438
  %2657 = vmatpush1.bf16.msra.mxu0 %v2437
  %2658 = vmatprep.subr.bf16.mxu0 %v2442
  %2659 = vmatpush1.bf16.msra.mxu0 %v2441
  %2660 = vmatprep.subr.bf16.mxu0 %v2446
  %2661 = vmatpush1.bf16.msra.mxu0 %v2445
  %2662 = vmatprep.mubr.bf16.mxu0 %v1911
  %2663 = vmatmul.mubr.bf16.gmra.mrb[0].mxu0 %v1910
  %v2664 = vpop.f32.mrb[0].mxu0
  %v2665 = vadd.f32 %v2612, %v2664
  %v2666 = vpop.f32.mrb[0].mxu0
  %v2667 = vadd.f32 %v2614, %v2666
  %v2668 = vpop.f32.mrb[0].mxu0
  %v2669 = vadd.f32 %v2616, %v2668
  %v2670 = vpop.f32.mrb[0].mxu0
  %v2671 = vadd.f32 %v2618, %v2670
  %2672 = vmatprep.mubr.bf16.mxu0 %v1915
  %2673 = vmatmul.mubr.bf16.gmra.mrb[0].mxu0 %v1914
  %v2674 = vpop.f32.mrb[0].mxu0
  %v2675 = vadd.f32 %v2622, %v2674
  %v2676 = vpop.f32.mrb[0].mxu0
  %v2677 = vadd.f32 %v2624, %v2676
  %v2678 = vpop.f32.mrb[0].mxu0
  %v2679 = vadd.f32 %v2626, %v2678
  %v2680 = vpop.f32.mrb[0].mxu0
  %v2681 = vadd.f32 %v2628, %v2680
  %2682 = vdwg.mxu0
  %2683 = vmatprep.subr.bf16.mxu0 %v2324
  %2684 = vmatpush1.bf16.msra.mxu0 %v2323
  %2685 = vmatprep.subr.bf16.mxu0 %v2328
  %2686 = vmatpush1.bf16.msra.mxu0 %v2327
  %2687 = vmatprep.subr.bf16.mxu0 %v2332
  %2688 = vmatpush1.bf16.msra.mxu0 %v2331
  %2689 = vmatprep.subr.bf16.mxu0 %v2336
  %2690 = vmatpush1.bf16.msra.mxu0 %v2335
  %2691 = vmatprep.subr.bf16.mxu0 %v2340
  %2692 = vmatpush1.bf16.msra.mxu0 %v2339
  %2693 = vmatprep.subr.bf16.mxu0 %v2344
  %2694 = vmatpush1.bf16.msra.mxu0 %v2343
  %2695 = vmatprep.subr.bf16.mxu0 %v2348
  %2696 = vmatpush1.bf16.msra.mxu0 %v2347
  %2697 = vmatprep.subr.bf16.mxu0 %v2352
  %2698 = vmatpush1.bf16.msra.mxu0 %v2351
  %2699 = vmatprep.subr.bf16.mxu0 %v2356
  %2700 = vmatpush1.bf16.msra.mxu0 %v2355
  %2701 = vmatprep.subr.bf16.mxu0 %v2360
  %2702 = vmatpush1.bf16.msra.mxu0 %v2359
  %2703 = vmatprep.subr.bf16.mxu0 %v2364
  %2704 = vmatpush1.bf16.msra.mxu0 %v2363
  %2705 = vmatprep.subr.bf16.mxu0 %v2368
  %2706 = vmatpush1.bf16.msra.mxu0 %v2367
  %2707 = vmatprep.subr.bf16.mxu0 %v2372
  %2708 = vmatpush1.bf16.msra.mxu0 %v2371
  %2709 = vmatprep.subr.bf16.mxu0 %v2376
  %2710 = vmatpush1.bf16.msra.mxu0 %v2375
  %2711 = vmatprep.subr.bf16.mxu0 %v2380
  %2712 = vmatpush1.bf16.msra.mxu0 %v2379
  %2713 = vmatprep.subr.bf16.mxu0 %v2384
  %2714 = vmatpush1.bf16.msra.mxu0 %v2383
  %2715 = vmatprep.mubr.bf16.mxu0 %v1909
  %2716 = vmatmul.mubr.bf16.gmra.mrb[0].mxu0 %v1908
  %v2717 = vpop.f32.mrb[0].mxu0
  %v2718 = vadd.f32 %v1928, %v2717
  %v2719 = vpop.f32.mrb[0].mxu0
  %v2720 = vadd.f32 %v1932, %v2719
  %v2721 = vpop.f32.mrb[0].mxu0
  %v2722 = vadd.f32 %v1928, %v2721
  %v2723 = vpop.f32.mrb[0].mxu0
  %v2724 = vadd.f32 %v1932, %v2723
  %2725 = vmatprep.mubr.bf16.mxu0 %v1913
  %2726 = vmatmul.mubr.bf16.gmra.mrb[0].mxu0 %v1912
  %v2727 = vpop.f32.mrb[0].mxu0
  %v2728 = vadd.f32 %v1928, %v2727
  %v2729 = vpop.f32.mrb[0].mxu0
  %v2730 = vadd.f32 %v1932, %v2729
  %v2731 = vpop.f32.mrb[0].mxu0
  %v2732 = vadd.f32 %v1928, %v2731
  %v2733 = vpop.f32.mrb[0].mxu0
  %v2734 = vadd.f32 %v1932, %v2733
  %2735 = vdwg.mxu0
  %2736 = vmatprep.subr.bf16.mxu0 %v2388
  %2737 = vmatpush1.bf16.msra.mxu0 %v2387
  %2738 = vmatprep.subr.bf16.mxu0 %v2392
  %2739 = vmatpush1.bf16.msra.mxu0 %v2391
  %2740 = vmatprep.subr.bf16.mxu0 %v2396
  %2741 = vmatpush1.bf16.msra.mxu0 %v2395
  %2742 = vmatprep.subr.bf16.mxu0 %v2400
  %2743 = vmatpush1.bf16.msra.mxu0 %v2399
  %2744 = vmatprep.subr.bf16.mxu0 %v2404
  %2745 = vmatpush1.bf16.msra.mxu0 %v2403
  %2746 = vmatprep.subr.bf16.mxu0 %v2408
  %2747 = vmatpush1.bf16.msra.mxu0 %v2407
  %2748 = vmatprep.subr.bf16.mxu0 %v2412
  %2749 = vmatpush1.bf16.msra.mxu0 %v2411
  %2750 = vmatprep.subr.bf16.mxu0 %v2416
  %2751 = vmatpush1.bf16.msra.mxu0 %v2415
  %2752 = vmatprep.subr.bf16.mxu0 %v2420
  %2753 = vmatpush1.bf16.msra.mxu0 %v2419
  %2754 = vmatprep.subr.bf16.mxu0 %v2424
  %2755 = vmatpush1.bf16.msra.mxu0 %v2423
  %2756 = vmatprep.subr.bf16.mxu0 %v2428
  %2757 = vmatpush1.bf16.msra.mxu0 %v2427
  %2758 = vmatprep.subr.bf16.mxu0 %v2432
  %2759 = vmatpush1.bf16.msra.mxu0 %v2431
  %2760 = vmatprep.subr.bf16.mxu0 %v2436
  %2761 = vmatpush1.bf16.msra.mxu0 %v2435
  %2762 = vmatprep.subr.bf16.mxu0 %v2440
  %2763 = vmatpush1.bf16.msra.mxu0 %v2439
  %2764 = vmatprep.subr.bf16.mxu0 %v2444
  %2765 = vmatpush1.bf16.msra.mxu0 %v2443
  %2766 = vmatprep.subr.bf16.mxu0 %v2448
  %2767 = vmatpush1.bf16.msra.mxu0 %v2447
  %2768 = vmatprep.mubr.bf16.mxu0 %v1911
  %2769 = vmatmul.mubr.bf16.gmra.mrb[0].mxu0 %v1910
  %v2770 = vpop.f32.mrb[0].mxu0
  %v2771 = vadd.f32 %v2718, %v2770
  %v2772 = vpop.f32.mrb[0].mxu0
  %v2773 = vadd.f32 %v2720, %v2772
  %v2774 = vpop.f32.mrb[0].mxu0
  %v2775 = vadd.f32 %v2722, %v2774
  %v2776 = vpop.f32.mrb[0].mxu0
  %v2777 = vadd.f32 %v2724, %v2776
  %2778 = vmatprep.mubr.bf16.mxu0 %v1915
  %2779 = vmatmul.mubr.bf16.gmra.mrb[0].mxu0 %v1914
  %v2780 = vpop.f32.mrb[0].mxu0
  %v2781 = vadd.f32 %v2728, %v2780
  %v2782 = vpop.f32.mrb[0].mxu0
  %v2783 = vadd.f32 %v2730, %v2782
  %v2784 = vpop.f32.mrb[0].mxu0
  %v2785 = vadd.f32 %v2732, %v2784
  %v2786 = vpop.f32.mrb[0].mxu0
  %v2787 = vadd.f32 %v2734, %v2786
  %2788 = vdwg.mxu0
  %v2789 = vmax.f32 %v2665, 0.0
  %v2790 = vmax.f32 %v2667, 0.0
  %v2791 = vmax.f32 %v2771, 0.0
  %v2792 = vmax.f32 %v2773, 0.0
  %v2793 = vmax.f32 %v2669, 0.0
  %v2794 = vmax.f32 %v2671, 0.0
  %v2795 = vmax.f32 %v2775, 0.0
  %v2796 = vmax.f32 %v2777, 0.0
  %v2797 = vmax.f32 %v2675, 0.0
  %v2798 = vmax.f32 %v2677, 0.0
  %v2799 = vmax.f32 %v2781, 0.0
  %v2800 = vmax.f32 %v2783, 0.0
  %v2801 = vmax.f32 %v2679, 0.0
  %v2802 = vmax.f32 %v2681, 0.0
  %v2803 = vmax.f32 %v2785, 0.0
  %v2804 = vmax.f32 %v2787, 0.0
  %v2805 = vpack.c.bf16 %v2793, %v2789
  %v2806 = vpack.c.bf16 %v2794, %v2790
  %v2807 = vpack.c.bf16 %v2795, %v2791
  %v2808 = vpack.c.bf16 %v2796, %v2792
  %v2809 = vpack.c.bf16 %v2801, %v2797
  %v2810 = vpack.c.bf16 %v2802, %v2798
  %v2811 = vpack.c.bf16 %v2803, %v2799
  %v2812 = vpack.c.bf16 %v2804, %v2800
  %v2814 = vlaneseq
  %v2815 = vshrl.u32 %v2814, 7
  %v2816 = vsub.s32 0, %v2815
  %v2817 = vrot.slane %v417, %v2816
  %v2883 = vunpack.c.l.b16 %v351
  %v2884 = vunpack.c.l.b16 %v352
  %v2885 = vunpack.c.l.b16 %v353
  %v2886 = vunpack.c.l.b16 %v354
  %v2887 = vunpack.c.l.b16 %v355
  %v2888 = vunpack.c.l.b16 %v356
  %v2889 = vunpack.c.l.b16 %v357
  %v2890 = vunpack.c.l.b16 %v358
  %v2891 = vunpack.c.l.b16 %v359
  %v2892 = vunpack.c.l.b16 %v360
  %v2893 = vunpack.c.l.b16 %v361
  %v2894 = vunpack.c.l.b16 %v362
  %v2895 = vunpack.c.l.b16 %v363
  %v2896 = vunpack.c.l.b16 %v364
  %v2897 = vunpack.c.l.b16 %v365
  %v2898 = vunpack.c.l.b16 %v366
  %v2899 = vunpack.c.l.b16 %v367
  %v2900 = vunpack.c.l.b16 %v368
  %v2901 = vunpack.c.l.b16 %v369
  %v2902 = vunpack.c.l.b16 %v370
  %v2903 = vunpack.c.l.b16 %v371
  %v2904 = vunpack.c.l.b16 %v372
  %v2905 = vunpack.c.l.b16 %v373
  %v2906 = vunpack.c.l.b16 %v374
  %v2907 = vunpack.c.l.b16 %v375
  %v2908 = vunpack.c.l.b16 %v376
  %v2909 = vunpack.c.l.b16 %v377
  %v2910 = vunpack.c.l.b16 %v378
  %v2911 = vunpack.c.l.b16 %v379
  %v2912 = vunpack.c.l.b16 %v380
  %v2913 = vunpack.c.l.b16 %v381
  %v2914 = vunpack.c.l.b16 %v382
  %v2915 = vunpack.c.l.b16 %v383
  %v2916 = vunpack.c.l.b16 %v384
  %v2917 = vunpack.c.l.b16 %v385
  %v2918 = vunpack.c.l.b16 %v386
  %v2919 = vunpack.c.l.b16 %v387
  %v2920 = vunpack.c.l.b16 %v388
  %v2921 = vunpack.c.l.b16 %v389
  %v2922 = vunpack.c.l.b16 %v390
  %v2923 = vunpack.c.l.b16 %v391
  %v2924 = vunpack.c.l.b16 %v392
  %v2925 = vunpack.c.l.b16 %v393
  %v2926 = vunpack.c.l.b16 %v394
  %v2927 = vunpack.c.l.b16 %v395
  %v2928 = vunpack.c.l.b16 %v396
  %v2929 = vunpack.c.l.b16 %v397
  %v2930 = vunpack.c.l.b16 %v398
  %v2931 = vunpack.c.l.b16 %v399
  %v2932 = vunpack.c.l.b16 %v400
  %v2933 = vunpack.c.l.b16 %v401
  %v2934 = vunpack.c.l.b16 %v402
  %v2935 = vunpack.c.l.b16 %v403
  %v2936 = vunpack.c.l.b16 %v404
  %v2937 = vunpack.c.l.b16 %v405
  %v2938 = vunpack.c.l.b16 %v406
  %v2939 = vunpack.c.l.b16 %v407
  %v2940 = vunpack.c.l.b16 %v408
  %v2941 = vunpack.c.l.b16 %v409
  %v2942 = vunpack.c.l.b16 %v410
  %v2943 = vunpack.c.l.b16 %v411
  %v2944 = vunpack.c.l.b16 %v412
  %v2945 = vunpack.c.l.b16 %v413
  %v2946 = vunpack.c.l.b16 %v414
  %v2947 = vpack.c.b16 %v2884, %v2883
  %v2948 = vpack.c.b16 %v2886, %v2885
  %v2949 = vpack.c.b16 %v2888, %v2887
  %v2950 = vpack.c.b16 %v2890, %v2889
  %v2951 = vpack.c.b16 %v2892, %v2891
  %v2952 = vpack.c.b16 %v2894, %v2893
  %v2953 = vpack.c.b16 %v2896, %v2895
  %v2954 = vpack.c.b16 %v2898, %v2897
  %v2955 = vpack.c.b16 %v2900, %v2899
  %v2956 = vpack.c.b16 %v2902, %v2901
  %v2957 = vpack.c.b16 %v2904, %v2903
  %v2958 = vpack.c.b16 %v2906, %v2905
  %v2959 = vpack.c.b16 %v2908, %v2907
  %v2960 = vpack.c.b16 %v2910, %v2909
  %v2961 = vpack.c.b16 %v2912, %v2911
  %v2962 = vpack.c.b16 %v2914, %v2913
  %v2963 = vpack.c.b16 %v2916, %v2915
  %v2964 = vpack.c.b16 %v2918, %v2917
  %v2965 = vpack.c.b16 %v2920, %v2919
  %v2966 = vpack.c.b16 %v2922, %v2921
  %v2967 = vpack.c.b16 %v2924, %v2923
  %v2968 = vpack.c.b16 %v2926, %v2925
  %v2969 = vpack.c.b16 %v2928, %v2927
  %v2970 = vpack.c.b16 %v2930, %v2929
  %v2971 = vpack.c.b16 %v2932, %v2931
  %v2972 = vpack.c.b16 %v2934, %v2933
  %v2973 = vpack.c.b16 %v2936, %v2935
  %v2974 = vpack.c.b16 %v2938, %v2937
  %v2975 = vpack.c.b16 %v2940, %v2939
  %v2976 = vpack.c.b16 %v2942, %v2941
  %v2977 = vpack.c.b16 %v2944, %v2943
  %v2978 = vpack.c.b16 %v2946, %v2945
  %3011 = vmatprep.subr.bf16.mxu0 0
  %3012 = vmatpush1.bf16.msra.mxu0 %v2947
  %3013 = vmatprep.subr.bf16.mxu0 0
  %3014 = vmatpush1.bf16.msra.mxu0 %v2948
  %3015 = vmatprep.subr.bf16.mxu0 0
  %3016 = vmatpush1.bf16.msra.mxu0 %v2949
  %3017 = vmatprep.subr.bf16.mxu0 0
  %3018 = vmatpush1.bf16.msra.mxu0 %v2950
  %3019 = vmatprep.subr.bf16.mxu0 0
  %3020 = vmatpush1.bf16.msra.mxu0 %v2951
  %3021 = vmatprep.subr.bf16.mxu0 0
  %3022 = vmatpush1.bf16.msra.mxu0 %v2952
  %3023 = vmatprep.subr.bf16.mxu0 0
  %3024 = vmatpush1.bf16.msra.mxu0 %v2953
  %3025 = vmatprep.subr.bf16.mxu0 0
  %3026 = vmatpush1.bf16.msra.mxu0 %v2954
  %3027 = vmatprep.subr.bf16.mxu0 0
  %3028 = vmatpush1.bf16.msra.mxu0 %v2955
  %3029 = vmatprep.subr.bf16.mxu0 0
  %3030 = vmatpush1.bf16.msra.mxu0 %v2956
  %3031 = vmatprep.subr.bf16.mxu0 0
  %3032 = vmatpush1.bf16.msra.mxu0 %v2957
  %3033 = vmatprep.subr.bf16.mxu0 0
  %3034 = vmatpush1.bf16.msra.mxu0 %v2958
  %3035 = vmatprep.subr.bf16.mxu0 0
  %3036 = vmatpush1.bf16.msra.mxu0 %v2959
  %3037 = vmatprep.subr.bf16.mxu0 0
  %3038 = vmatpush1.bf16.msra.mxu0 %v2960
  %3039 = vmatprep.subr.bf16.mxu0 0
  %3040 = vmatpush1.bf16.msra.mxu0 %v2961
  %3041 = vmatprep.subr.bf16.mxu0 0
  %3042 = vmatpush1.bf16.msra.mxu0 %v2962
  %3043 = vmatprep.mubr.bf16.mxu0 %v2806
  %3044 = vmatmul.mubr.bf16.gmra.mrb[0].mxu0 %v2805
  %v3045 = vpop.f32.mrb[0].mxu0
  %v3046 = vadd.f32 %v2817, %v3045
  %v3047 = vpop.f32.mrb[0].mxu0
  %v3048 = vpop.f32.mrb[0].mxu0
  %v3049 = vadd.f32 %v2817, %v3048
  %v3050 = vpop.f32.mrb[0].mxu0
  %3051 = vmatprep.mubr.bf16.mxu0 %v2810
  %3052 = vmatmul.mubr.bf16.gmra.mrb[0].mxu0 %v2809
  %v3053 = vpop.f32.mrb[0].mxu0
  %v3054 = vadd.f32 %v2817, %v3053
  %v3055 = vpop.f32.mrb[0].mxu0
  %v3056 = vpop.f32.mrb[0].mxu0
  %v3057 = vadd.f32 %v2817, %v3056
  %v3058 = vpop.f32.mrb[0].mxu0
  %3059 = vdwg.mxu0
  %3060 = vmatprep.subr.bf16.mxu0 0
  %3061 = vmatpush1.bf16.msra.mxu0 %v2963
  %3062 = vmatprep.subr.bf16.mxu0 0
  %3063 = vmatpush1.bf16.msra.mxu0 %v2964
  %3064 = vmatprep.subr.bf16.mxu0 0
  %3065 = vmatpush1.bf16.msra.mxu0 %v2965
  %3066 = vmatprep.subr.bf16.mxu0 0
  %3067 = vmatpush1.bf16.msra.mxu0 %v2966
  %3068 = vmatprep.subr.bf16.mxu0 0
  %3069 = vmatpush1.bf16.msra.mxu0 %v2967
  %3070 = vmatprep.subr.bf16.mxu0 0
  %3071 = vmatpush1.bf16.msra.mxu0 %v2968
  %3072 = vmatprep.subr.bf16.mxu0 0
  %3073 = vmatpush1.bf16.msra.mxu0 %v2969
  %3074 = vmatprep.subr.bf16.mxu0 0
  %3075 = vmatpush1.bf16.msra.mxu0 %v2970
  %3076 = vmatprep.subr.bf16.mxu0 0
  %3077 = vmatpush1.bf16.msra.mxu0 %v2971
  %3078 = vmatprep.subr.bf16.mxu0 0
  %3079 = vmatpush1.bf16.msra.mxu0 %v2972
  %3080 = vmatprep.subr.bf16.mxu0 0
  %3081 = vmatpush1.bf16.msra.mxu0 %v2973
  %3082 = vmatprep.subr.bf16.mxu0 0
  %3083 = vmatpush1.bf16.msra.mxu0 %v2974
  %3084 = vmatprep.subr.bf16.mxu0 0
  %3085 = vmatpush1.bf16.msra.mxu0 %v2975
  %3086 = vmatprep.subr.bf16.mxu0 0
  %3087 = vmatpush1.bf16.msra.mxu0 %v2976
  %3088 = vmatprep.subr.bf16.mxu0 0
  %3089 = vmatpush1.bf16.msra.mxu0 %v2977
  %3090 = vmatprep.subr.bf16.mxu0 0
  %3091 = vmatpush1.bf16.msra.mxu0 %v2978
  %3092 = vmatprep.mubr.bf16.mxu0 %v2808
  %3093 = vmatmul.mubr.bf16.gmra.mrb[0].mxu0 %v2807
  %v3094 = vpop.f32.mrb[0].mxu0
  %v3095 = vadd.f32 %v3046, %v3094
  %v3096 = vpop.f32.mrb[0].mxu0
  %v3097 = vpop.f32.mrb[0].mxu0
  %v3098 = vadd.f32 %v3049, %v3097
  %v3099 = vpop.f32.mrb[0].mxu0
  %3100 = vmatprep.mubr.bf16.mxu0 %v2812
  %3101 = vmatmul.mubr.bf16.gmra.mrb[0].mxu0 %v2811
  %v3102 = vpop.f32.mrb[0].mxu0
  %v3103 = vadd.f32 %v3054, %v3102
  %v3104 = vpop.f32.mrb[0].mxu0
  %v3105 = vpop.f32.mrb[0].mxu0
  %v3106 = vadd.f32 %v3057, %v3105
  %v3107 = vpop.f32.mrb[0].mxu0
  %3108 = vdwg.mxu0
  %3109 = vst [vmem:[%s7] sm:$0xff] %v3095
  %3110 = vst [vmem:[%s7 + $0x8] sm:$0xff] %v3098
  %3111 = vst [vmem:[%s7 + $0x10] sm:$0xff] %v3103
  %3112 = vst [vmem:[%s7 + $0x18] sm:$0xff] %v3106
  // Predicated region
  $region30: #{mlp_net_forward.1} parent=0 // pred_check
    _
  $region31: #{mlp_net_forward.1} parent=0 // pred_check_branch
    %3114 = sbr.rel (0) target = $region33
  $region32: #{mlp_net_forward.1} parent=0 // pred_region
    _
  $region33: #{mlp_net_forward.1} parent=0 // pred_fallthru
    _
  // Predicated region
  $region34: #{mlp_net_forward.1} parent=0 // pred_check
    _
  $region35: #{mlp_net_forward.1} parent=0 // pred_check_branch
    %3116 = sbr.rel (0) target = $region37
  $region36: #{mlp_net_forward.1} parent=0 // pred_region
    _
  $region37: #{mlp_net_forward.1} parent=0 // pred_fallthru
    _

</llo_original>
